<compile_context>
chip_gen: v6e
topology: v6e:2x2x1
jax: 0.10.0
libtpu: 0.0.40
codegen_flags: <defaults>
</compile_context>

<pallas_src>
import math
from functools import partial

import jax
import jax.numpy as jnp
from jax.experimental import pallas as pl
from jax.experimental.pallas import tpu as pltpu

_VMEM_LIMIT_CACHE = None


def _vmem_limit_bytes():
    """Per-generation VMEM limit: ~3/4 of physical VMEM, capped at 100 MiB."""
    global _VMEM_LIMIT_CACHE
    if _VMEM_LIMIT_CACHE is None:
        try:
            cap = int(pltpu.get_tpu_info().vmem_capacity_bytes)
            _VMEM_LIMIT_CACHE = min(cap * 3 // 4, 100 * 1024 * 1024)
        except Exception:
            _VMEM_LIMIT_CACHE = 40 * 1024 * 1024  # conservative fallback (safe on v7x)
    return _VMEM_LIMIT_CACHE


def _quick_gelu(y):
    # x * sigmoid(1.702 x), written with tanh for robust lowering on all generations.
    return y * (0.5 * (jnp.tanh(0.851 * y) + 1.0))


# ------------------- fused LayerNorm + Linear (+ activation), full-K tiles ------------------- #

def _ln_linear_kernel(x_ref, g_ref, bt_ref, w_ref, b_ref, o_ref, *, eps, activation):
    x = x_ref[...].astype(jnp.float32)
    mu = jnp.mean(x, axis=-1, keepdims=True)
    xc = x - mu
    var = jnp.mean(xc * xc, axis=-1, keepdims=True)
    h = xc * jax.lax.rsqrt(var + eps) * g_ref[...].astype(jnp.float32) + bt_ref[...].astype(jnp.float32)
    y = jnp.dot(h.astype(jnp.bfloat16), w_ref[...], preferred_element_type=jnp.float32)
    y = y + b_ref[...].astype(jnp.float32)
    if activation is not None:
        y = activation(y)
    o_ref[...] = y.astype(o_ref.dtype)


def ln_linear(x, gamma, beta, w, b, *, activation=None, eps=1e-6,
              out_dtype=None, tm=256, tn=256):
    """out = act(LayerNorm(x) @ w + b).  Full-K row tiles (no k loop, no accumulator)."""
    M, K = x.shape
    Kw, N = w.shape
    assert K == Kw and b.shape == (1, N)
    tm, tn = min(tm, M), min(tn, N)
    assert M % tm == 0 and N % tn == 0
    out_dtype = out_dtype or x.dtype
    return pl.pallas_call(
        partial(_ln_linear_kernel, eps=eps, activation=activation),
        out_shape=jax.ShapeDtypeStruct((M, N), out_dtype),
        grid=(M // tm, N // tn),
        in_specs=[
            pl.BlockSpec((tm, K), lambda i, j: (i, 0)),
            pl.BlockSpec((1, K), lambda i, j: (0, 0)),
            pl.BlockSpec((1, K), lambda i, j: (0, 0)),
            pl.BlockSpec((K, tn), lambda i, j: (0, j)),
            pl.BlockSpec((1, tn), lambda i, j: (0, j)),
        ],
        out_specs=pl.BlockSpec((tm, tn), lambda i, j: (i, j)),
        compiler_params=pltpu.CompilerParams(
            dimension_semantics=("parallel", "parallel"),
            vmem_limit_bytes=_vmem_limit_bytes(),
        ),
    )(x, gamma, beta, w, b)


# --------------------------- Linear + residual add (fused epilogue) -------------------------- #

def _res_linear_kernel(x_ref, w_ref, b_ref, r_ref, o_ref):
    y = jnp.dot(x_ref[...].astype(jnp.bfloat16), w_ref[...], preferred_element_type=jnp.float32)
    y = y + b_ref[...].astype(jnp.float32) + r_ref[...].astype(jnp.float32)
    o_ref[...] = y.astype(o_ref.dtype)


def res_linear(x, w, b, residual, *, out_dtype=None, tm=256, tn=256):
    """out = residual + (x @ w + b).  Full-K row tiles."""
    M, K = x.shape
    Kw, N = w.shape
    assert K == Kw and b.shape == (1, N) and residual.shape == (M, N)
    tm, tn = min(tm, M), min(tn, N)
    assert M % tm == 0 and N % tn == 0
    out_dtype = out_dtype or residual.dtype
    return pl.pallas_call(
        _res_linear_kernel,
        out_shape=jax.ShapeDtypeStruct((M, N), out_dtype),
        grid=(M // tm, N // tn),
        in_specs=[
            pl.BlockSpec((tm, K), lambda i, j: (i, 0)),
            pl.BlockSpec((K, tn), lambda i, j: (0, j)),
            pl.BlockSpec((1, tn), lambda i, j: (0, j)),
            pl.BlockSpec((tm, tn), lambda i, j: (i, j)),
        ],
        out_specs=pl.BlockSpec((tm, tn), lambda i, j: (i, j)),
        compiler_params=pltpu.CompilerParams(
            dimension_semantics=("parallel", "parallel"),
            vmem_limit_bytes=_vmem_limit_bytes(),
        ),
    )(x, w, b, residual)


# ------------------------ RoPE applied once to the q/k columns of qkv ------------------------ #

def _rope_kernel(x_ref, cos_ref, sin_ref, o_ref, *, half):
    x = x_ref[...].astype(jnp.float32)
    x1 = x[:, :half]
    x2 = x[:, half:]
    cos = cos_ref[...]
    sin = sin_ref[...]
    o_ref[...] = jnp.concatenate(
        [x1 * cos - x2 * sin, x2 * cos + x1 * sin], axis=-1
    ).astype(o_ref.dtype)


def rope_qk(qkv, cos, sin, num_heads, *, tm=256):
    """Apply RoPE to the q and k column sections of qkv (L, 3D) -> roped (L, 2D)."""
    L, threeD = qkv.shape
    D = threeD // 3
    hd = D // num_heads
    half = hd // 2
    H = num_heads
    tm = min(tm, L)
    assert L % tm == 0
    return pl.pallas_call(
        partial(_rope_kernel, half=half),
        out_shape=jax.ShapeDtypeStruct((L, 2 * D), qkv.dtype),
        grid=(2 * H, L // tm),                       # q heads 0..H-1, k heads H..2H-1
        in_specs=[
            pl.BlockSpec((tm, hd), lambda c, i: (i, c)),
            pl.BlockSpec((tm, half), lambda c, i: (i, 0)),
            pl.BlockSpec((tm, half), lambda c, i: (i, 0)),
        ],
        out_specs=pl.BlockSpec((tm, hd), lambda c, i: (i, c)),
        compiler_params=pltpu.CompilerParams(
            dimension_semantics=("parallel", "parallel"),
            vmem_limit_bytes=_vmem_limit_bytes(),
        ),
    )(qkv, cos, sin)


# -------------------- flash attention over variable-length (NaViT) segments ------------------ #

def _flash_attn_kernel(qlo_ref, qhi_ref, klo_ref, khi_ref,        # scalar-prefetch (SMEM)
                       q_ref, k_ref, v_ref, segq_ref, segk_ref,   # VMEM tiles
                       o_ref, m_scr, l_scr, acc_scr):
    qi = pl.program_id(1)
    ki = pl.program_id(2)

    @pl.when(ki == 0)
    def _():
        m_scr[...] = jnp.full_like(m_scr, -1e30)
        l_scr[...] = jnp.zeros_like(l_scr)
        acc_scr[...] = jnp.zeros_like(acc_scr)

    # Skip compute for (q-tile, k-tile) pairs whose segment ranges do not intersect
    # (block-diagonal mask -> useful work is O(sum(len_i^2)), not O(L^2)).
    overlap = jnp.logical_and(qlo_ref[qi] <= khi_ref[ki], klo_ref[ki] <= qhi_ref[qi])

    @pl.when(overlap)
    def _():
        # scores (tq, tk) = q @ k^T  -- bf16 operands, f32 accumulation; the
        # 1/sqrt(head_dim) scale is pre-folded into the q projection weights.
        s = jax.lax.dot_general(
            q_ref[...], k_ref[...],
            dimension_numbers=(((1,), (1,)), ((), ())),
            preferred_element_type=jnp.float32,
        )
        mask = segq_ref[...] == segk_ref[...]          # (tq,1) == (1,tk) -> (tq,tk)
        s = jnp.where(mask, s, -1e30)

        m_prev = m_scr[...]
        m_new = jnp.maximum(m_prev, jnp.max(s, axis=-1, keepdims=True))
        alpha = jnp.exp(m_prev - m_new)
        p = jnp.where(mask, jnp.exp(s - m_new), 0.0)   # masked lanes contribute exactly 0
        l_scr[...] = alpha * l_scr[...] + jnp.sum(p, axis=-1, keepdims=True)
        acc_scr[...] = alpha * acc_scr[...] + jnp.dot(
            p.astype(jnp.bfloat16), v_ref[...], preferred_element_type=jnp.float32
        )
        m_scr[...] = m_new

    @pl.when(ki == pl.num_programs(2) - 1)
    def _():
        # Exact reciprocal (runs once per (head, q-tile); not in the hot loop).
        o_ref[...] = (acc_scr[...] * (1.0 / l_scr[...])).astype(o_ref.dtype)


def flash_block_attention(qk_roped, qkv, seg, num_heads, *, tq=256, tk=256,
                          out_dtype=jnp.bfloat16):
    """qk_roped: (L, 2D) = [roped q heads | roped k heads]; qkv: (L, 3D) (v in last D cols).
    seg: (L,) int32 segment ids.  Returns attention output directly in (L, D) layout."""
    L, twoD = qk_roped.shape
    D = twoD // 2
    H = num_heads
    hd = D // H
    tq, tk = min(tq, L), min(tk, L)
    assert L % tq == 0 and L % tk == 0
    # TODO(synk): real Qwen2-VL head_dim=80; pad head_dim to 128 (or switch to an
    # (H, L, hd_padded) layout) so per-head column slicing stays lane-aligned.
    assert hd % 128 == 0, "per-head column BlockSpecs need head_dim to be a multiple of 128"

    nq, nk = L // tq, L // tk
    seg = seg.astype(jnp.int32)
    seg_q = seg[:, None]                      # (L, 1)
    seg_k = seg[None, :]                      # (1, L)
    qlo = seg.reshape(nq, tq).min(axis=1)     # per-q-tile segment range
    qhi = seg.reshape(nq, tq).max(axis=1)
    klo = seg.reshape(nk, tk).min(axis=1)     # per-k-tile segment range
    khi = seg.reshape(nk, tk).max(axis=1)

    grid_spec = pltpu.PrefetchScalarGridSpec(
        num_scalar_prefetch=4,
        grid=(H, nq, nk),
        in_specs=[
            pl.BlockSpec((tq, hd), lambda h, qi, ki, qlo, qhi, klo, khi: (qi, h)),          # q
            pl.BlockSpec((tk, hd), lambda h, qi, ki, qlo, qhi, klo, khi: (ki, H + h)),      # k
            pl.BlockSpec((tk, hd), lambda h, qi, ki, qlo, qhi, klo, khi: (ki, 2 * H + h)),  # v
            pl.BlockSpec((tq, 1), lambda h, qi, ki, qlo, qhi, klo, khi: (qi, 0)),           # seg rows
            pl.BlockSpec((1, tk), lambda h, qi, ki, qlo, qhi, klo, khi: (0, ki)),           # seg cols
        ],
        out_specs=pl.BlockSpec((tq, hd), lambda h, qi, ki, qlo, qhi, klo, khi: (qi, h)),
        scratch_shapes=[
            pltpu.VMEM((tq, 1), jnp.float32),    # running max
            pltpu.VMEM((tq, 1), jnp.float32),    # running denom
            pltpu.VMEM((tq, hd), jnp.float32),   # running numerator
        ],
    )
    return pl.pallas_call(
        _flash_attn_kernel,
        out_shape=jax.ShapeDtypeStruct((L, D), out_dtype),
        grid_spec=grid_spec,
        compiler_params=pltpu.CompilerParams(
            dimension_semantics=("parallel", "parallel", "arbitrary"),
            vmem_limit_bytes=_vmem_limit_bytes(),
        ),
    )(qlo, qhi, klo, khi, qk_roped, qk_roped, qkv, seg_q, seg_k)


# ----------------------------------- module-level forward ------------------------------------ #

def qwen2vl_vision_block_forward(x, cu_seqlens, rotary_pos_emb, params, num_heads):
    """Qwen2VLVisionBlock.forward (NaViT packed sequence of length L, hidden D)."""
    L, D = x.shape
    H = num_heads
    hd = D // H
    scale = 1.0 / math.sqrt(hd)

    # Pre-cast weights to bf16 once; fold 1/sqrt(head_dim) into the q columns of the QKV proj.
    col_scale = jnp.concatenate(
        [jnp.full((D,), scale, jnp.float32), jnp.ones((2 * D,), jnp.float32)]
    )
    w_qkv = (params["w_qkv"].astype(jnp.float32) * col_scale[None, :]).astype(jnp.bfloat16)
    b_qkv = params["b_qkv"].astype(jnp.float32) * col_scale[None, :]
    w_proj = params["w_proj"].astype(jnp.bfloat16)
    w_fc1 = params["w_fc1"].astype(jnp.bfloat16)
    w_fc2 = params["w_fc2"].astype(jnp.bfloat16)

    # RoPE tables (half-width, shared by q and k).
    freqs = rotary_pos_emb.astype(jnp.float32)          # (L, hd//2)
    cos = jnp.cos(freqs)
    sin = jnp.sin(freqs)

    # Segment ids from cu_seqlens (tiny (L,) ints; no L^2 mask is ever materialized).
    pos = jnp.arange(L, dtype=jnp.int32)
    seg = jnp.searchsorted(cu_seqlens[1:].astype(jnp.int32), pos, side="right").astype(jnp.int32)

    # LN1 + QKV projection (fused), bf16 activations.
    qkv = ln_linear(x, params["ln1_g"], params["ln1_b"], w_qkv, b_qkv,
                    out_dtype=jnp.bfloat16)                                  # (L, 3D)

    # RoPE applied once to q/k columns (outside the attention kv loop).
    qk = rope_qk(qkv, cos, sin, H)                                           # (L, 2D)

    # Flash attention over block-diagonal segments (output already in (L, D) layout).
    attn = flash_block_attention(qk, qkv, seg, H)                            # (L, D) bf16

    # Output projection + residual add (fused epilogue).
    x = res_linear(attn, w_proj, params["b_proj"], x, out_dtype=x.dtype)

    # LN2 + fc1 + quick_gelu (fused), then fc2 + residual (fused).
    h = ln_linear(x, params["ln2_g"], params["ln2_b"], w_fc1, params["b_fc1"],
                  activation=_quick_gelu, out_dtype=jnp.bfloat16, tn=512)
    return res_linear(h, w_fc2, params["b_fc2"], x, out_dtype=x.dtype)


# --------------------------------- pure-JAX f32 reference ------------------------------------ #

def _reference(x, cu_seqlens, rotary, params, num_heads):
    L, D = x.shape
    hd = D // num_heads

    def ln(h, g, b):
        mu = h.mean(-1, keepdims=True)
        var = ((h - mu) ** 2).mean(-1, keepdims=True)
        return (h - mu) / jnp.sqrt(var + 1e-6) * g[0] + b[0]

    def attn(h):
        qkv = h @ params["w_qkv"] + params["b_qkv"][0]
        qkv = qkv.reshape(L, 3, num_heads, hd).transpose(1, 2, 0, 3)
        q, k, v = qkv[0], qkv[1], qkv[2]
        cos = jnp.cos(rotary)[None]
        sin = jnp.sin(rotary)[None]

        def rope(t):
            t1, t2 = t[..., : hd // 2], t[..., hd // 2:]
            return jnp.concatenate([t1 * cos - t2 * sin, t1 * sin + t2 * cos], axis=-1)

        q, k = rope(q), rope(k)
        pos = jnp.arange(L)
        seg = jnp.searchsorted(cu_seqlens[1:], pos, side="right")
        mask = seg[:, None] == seg[None, :]
        s = jnp.einsum("hld,hmd->hlm", q, k) / math.sqrt(hd)
        s = jnp.where(mask[None], s, -1e30)
        p = jax.nn.softmax(s, axis=-1)
        o = jnp.einsum("hlm,hmd->hld", p, v)
        o = o.transpose(1, 0, 2).reshape(L, D)
        return o @ params["w_proj"] + params["b_proj"][0]

    x = x + attn(ln(x, params["ln1_g"], params["ln1_b"]))
    h = ln(x, params["ln2_g"], params["ln2_b"])
    h = h @ params["w_fc1"] + params["b_fc1"][0]
    h = _quick_gelu(h)
    h = h @ params["w_fc2"] + params["b_fc2"][0]
    return x + h


# -------------------------------------------- main -------------------------------------------- #

if __name__ == "__main__":
    L, D, H = 512, 256, 2          # seq_len, hidden_size, num_heads -> head_dim = 128
    MLP_RATIO = 4
    hd = D // H
    Dmlp = D * MLP_RATIO

    key = jax.random.PRNGKey(0)
    ks = jax.random.split(key, 14)

    x = jax.random.normal(ks[0], (L, D), jnp.float32)
    rotary = jax.random.normal(ks[1], (L, hd // 2), jnp.float32)
    cu_seqlens = jnp.array([0, 200, 512], dtype=jnp.int32)   # two variable-length segments

    # nn.Linear weights stored pre-transposed (in, out); biases as (1, out).
    params = {
        "ln1_g": jax.random.normal(ks[2], (1, D), jnp.float32) * 0.1 + 1.0,
        "ln1_b": jax.random.normal(ks[3], (1, D), jnp.float32) * 0.1,
        "w_qkv": jax.random.normal(ks[4], (D, 3 * D), jnp.float32) * 0.05,
        "b_qkv": jax.random.normal(ks[5], (1, 3 * D), jnp.float32) * 0.05,
        "w_proj": jax.random.normal(ks[6], (D, D), jnp.float32) * 0.05,
        "b_proj": jax.random.normal(ks[7], (1, D), jnp.float32) * 0.05,
        "ln2_g": jax.random.normal(ks[8], (1, D), jnp.float32) * 0.1 + 1.0,
        "ln2_b": jax.random.normal(ks[9], (1, D), jnp.float32) * 0.1,
        "w_fc1": jax.random.normal(ks[10], (D, Dmlp), jnp.float32) * 0.05,
        "b_fc1": jax.random.normal(ks[11], (1, Dmlp), jnp.float32) * 0.05,
        "w_fc2": jax.random.normal(ks[12], (Dmlp, D), jnp.float32) * 0.05,
        "b_fc2": jax.random.normal(ks[13], (1, D), jnp.float32) * 0.05,
    }

    out = qwen2vl_vision_block_forward(x, cu_seqlens, rotary, params, H)
    out = jax.block_until_ready(out)
    assert out.shape == (L, D) and out.dtype == jnp.float32

    ref = _reference(x, cu_seqlens, rotary, params, H)
    max_err = float(jnp.max(jnp.abs(out - ref)))
    # bf16 weight/activation storage with f32 accumulation vs pure-f32 reference.
    assert jnp.allclose(out, ref, atol=5e-2, rtol=5e-2), f"mismatch vs reference (max abs err {max_err})"

    print("KERNEL_OK")
</pallas_src>

<mosaic_0001>
module attributes {stable_mosaic.version = 11 : i64} {
  func.func @_ln_linear_kernel(%arg0: i32, %arg1: i32, %arg2: memref<256x256xf32, #tpu.memory_space<vmem>>, %arg3: memref<1x256xf32, #tpu.memory_space<vmem>>, %arg4: memref<1x256xf32, #tpu.memory_space<vmem>>, %arg5: memref<256x256xbf16, #tpu.memory_space<vmem>>, %arg6: memref<1x256xf32, #tpu.memory_space<vmem>>, %arg7: memref<256x256xbf16, #tpu.memory_space<vmem>>) attributes {dimension_semantics = [#tpu.dimension_semantics<parallel>, #tpu.dimension_semantics<parallel>], iteration_bounds = array<i64: 2, 3>, scalar_prefetch = 0 : i64, scratch_operands = 0 : i64, tpu.core_type = #tpu.core_type<tc>, window_params = [{transform_indices = @transform_0, window_bounds = array<i64: 256, 256>}, {pipeline_mode = #tpu.pipeline_mode<synchronous>, transform_indices = @transform_1, window_bounds = array<i64: 1, 256>}, {pipeline_mode = #tpu.pipeline_mode<synchronous>, transform_indices = @transform_2, window_bounds = array<i64: 1, 256>}, {transform_indices = @transform_3, window_bounds = array<i64: 256, 256>}, {transform_indices = @transform_4, window_bounds = array<i64: 1, 256>}, {transform_indices = @transform_5, window_bounds = array<i64: 256, 256>}]} {
    %c0 = arith.constant 0 : index
    %c0_0 = arith.constant 0 : index
    %0 = vector.load %arg2[%c0, %c0_0] : memref<256x256xf32, #tpu.memory_space<vmem>>, vector<256x256xf32>
    %cst = arith.constant dense<0.000000e+00> : vector<256xf32>
    %1 = vector.multi_reduction <add>, %0, %cst [1] : vector<256x256xf32> to vector<256xf32>
    %2 = vector.shape_cast %1 : vector<256xf32> to vector<256x1xf32>
    %cst_1 = arith.constant 2.560000e+02 : f32
    %3 = vector.broadcast %cst_1 : f32 to vector<256x1xf32>
    %4 = arith.divf %2, %3 : vector<256x1xf32>
    %5 = vector.broadcast %4 : vector<256x1xf32> to vector<256x256xf32>
    %6 = arith.subf %0, %5 : vector<256x256xf32>
    %7 = arith.mulf %6, %6 : vector<256x256xf32>
    %cst_2 = arith.constant dense<0.000000e+00> : vector<256xf32>
    %8 = vector.multi_reduction <add>, %7, %cst_2 [1] : vector<256x256xf32> to vector<256xf32>
    %9 = vector.shape_cast %8 : vector<256xf32> to vector<256x1xf32>
    %cst_3 = arith.constant 2.560000e+02 : f32
    %10 = vector.broadcast %cst_3 : f32 to vector<256x1xf32>
    %11 = arith.divf %9, %10 : vector<256x1xf32>
    %cst_4 = arith.constant 9.99999997E-7 : f32
    %12 = vector.broadcast %cst_4 : f32 to vector<256x1xf32>
    %13 = arith.addf %11, %12 : vector<256x1xf32>
    %14 = math.rsqrt %13 : vector<256x1xf32>
    %15 = vector.broadcast %14 : vector<256x1xf32> to vector<256x256xf32>
    %16 = arith.mulf %6, %15 : vector<256x256xf32>
    %c0_5 = arith.constant 0 : index
    %c0_6 = arith.constant 0 : index
    %17 = vector.load %arg3[%c0_5, %c0_6] : memref<1x256xf32, #tpu.memory_space<vmem>>, vector<1x256xf32>
    %18 = vector.broadcast %17 : vector<1x256xf32> to vector<256x256xf32>
    %19 = arith.mulf %16, %18 : vector<256x256xf32>
    %c0_7 = arith.constant 0 : index
    %c0_8 = arith.constant 0 : index
    %20 = vector.load %arg4[%c0_7, %c0_8] : memref<1x256xf32, #tpu.memory_space<vmem>>, vector<1x256xf32>
    %21 = vector.broadcast %20 : vector<1x256xf32> to vector<256x256xf32>
    %22 = arith.addf %19, %21 : vector<256x256xf32>
    %23 = arith.truncf %22 : vector<256x256xf32> to vector<256x256xbf16>
    %c0_9 = arith.constant 0 : index
    %c0_10 = arith.constant 0 : index
    %24 = vector.load %arg5[%c0_9, %c0_10] : memref<256x256xbf16, #tpu.memory_space<vmem>>, vector<256x256xbf16>
    %cst_11 = arith.constant dense<0.000000e+00> : vector<256x256xf32>
    %25 = tpu.matmul %23, %24, %cst_11 {dimension_numbers = #tpu.dot_dimension_numbers<[1], [0], [0], [1], [0, 0, 1, 1], [], []>} : vector<256x256xbf16>, vector<256x256xbf16>, vector<256x256xf32> -> vector<256x256xf32>
    %c0_12 = arith.constant 0 : index
    %c0_13 = arith.constant 0 : index
    %26 = vector.load %arg6[%c0_12, %c0_13] : memref<1x256xf32, #tpu.memory_space<vmem>>, vector<1x256xf32>
    %27 = vector.broadcast %26 : vector<1x256xf32> to vector<256x256xf32>
    %28 = arith.addf %25, %27 : vector<256x256xf32>
    %29 = arith.truncf %28 : vector<256x256xf32> to vector<256x256xbf16>
    %c0_14 = arith.constant 0 : index
    %c0_15 = arith.constant 0 : index
    %30 = vector.load %arg7[%c0_14, %c0_15] : memref<256x256xbf16, #tpu.memory_space<vmem>>, vector<256x256xbf16>
    tpu.vector_store %arg7[%c0_14, %c0_15], %29 {strides = array<i32>} : memref<256x256xbf16, #tpu.memory_space<vmem>>, vector<256x256xbf16>,
    return
  }
  func.func @transform_0(%arg0: i32, %arg1: i32) -> (i32, i32) {
    %c0_i32 = arith.constant 0 : i32
    %c0_i32_0 = arith.constant 0 : i32
    return %arg0, %c0_i32 : i32, i32
  }
  func.func @transform_1(%arg0: i32, %arg1: i32) -> (i32, i32) {
    %c0_i32 = arith.constant 0 : i32
    %c0_i32_0 = arith.constant 0 : i32
    %c0_i32_1 = arith.constant 0 : i32
    return %c0_i32, %c0_i32_0 : i32, i32
  }
  func.func @transform_2(%arg0: i32, %arg1: i32) -> (i32, i32) {
    %c0_i32 = arith.constant 0 : i32
    %c0_i32_0 = arith.constant 0 : i32
    %c0_i32_1 = arith.constant 0 : i32
    return %c0_i32, %c0_i32_0 : i32, i32
  }
  func.func @transform_3(%arg0: i32, %arg1: i32) -> (i32, i32) {
    %c0_i32 = arith.constant 0 : i32
    %c0_i32_0 = arith.constant 0 : i32
    return %c0_i32, %arg1 : i32, i32
  }
  func.func @transform_4(%arg0: i32, %arg1: i32) -> (i32, i32) {
    %c0_i32 = arith.constant 0 : i32
    %c0_i32_0 = arith.constant 0 : i32
    return %c0_i32, %arg1 : i32, i32
  }
  func.func @transform_5(%arg0: i32, %arg1: i32) -> (i32, i32) {
    %c0_i32 = arith.constant 0 : i32
    return %arg0, %arg1 : i32, i32
  }
}

</mosaic_0001>

<llo_original>
// kernel: tpu_custom_call.1
$region0: #{tpu_custom_call.1}
  #allocation0 [shape = 'u32[]', space=smem, size = 0x4, offset = 0x4, fixed_abs, tag = 'smem constant byte address 0x4 - core index']
  #allocation1 [shape = 'u32[144,128]{1,0:T(1,128)}', space=vmem, size = 0x12000, scoped, tag = 'internal scratch']
  %s0 = inlined_call_operand.hbm [shape: f32[512,256], index: 0, kind: input, shape index: {}]
  %s1 = inlined_call_operand.hbm [shape: f32[1,256], index: 1, kind: input, shape index: {}]
  %s2 = inlined_call_operand.hbm [shape: f32[1,256], index: 2, kind: input, shape index: {}]
  %s3 = inlined_call_operand.hbm [shape: bf16[256,768], index: 3, kind: input, shape index: {}]
  %s4 = inlined_call_operand.vmem [shape: f32[1,768], index: 4, kind: input, shape index: {}]
  %s5 = inlined_call_operand.hbm [shape: bf16[512,768], index: 5, kind: output, shape index: {}]
  %s6 = sld [smem:[#allocation0]]
  $region69: #{tpu_custom_call.1} parent=0
    _
  %s8 = ssub.s32 1, %s6
  %s9 = scalar_select 0, %s8, %s6
  $region1: #{tpu_custom_call.1} parent=0
    #allocation2 [shape = 'u8[524288]{0}', space=vmem, size = 0x80000, scoped, tag = 'input window, operand 0']
    #allocation3 [shape = 's32[2]{0}', space=sflag, size = 0x8, scoped, tag = 'scoped memory for tpu_custom_call.1']
    #allocation4 [shape = 's32[2]{0}', space=sflag, size = 0x8, scoped, tag = 'scoped memory for tpu_custom_call.1']
    #allocation5 [shape = 'u8[1024]{0}', space=vmem, size = 0x400, scoped, tag = 'input window, operand 1, single buffered']
    #allocation6 [shape = 's32[1]{0}', space=sflag, size = 0x4, scoped, tag = 'scoped memory for tpu_custom_call.1']
    #allocation7 [shape = 'u8[1024]{0}', space=vmem, size = 0x400, scoped, tag = 'input window, operand 2, single buffered']
    #allocation8 [shape = 'u8[262144]{0}', space=vmem, size = 0x40000, scoped, tag = 'input window, operand 3']
    #allocation9 [shape = 's32[2]{0}', space=sflag, size = 0x8, scoped, tag = 'scoped memory for tpu_custom_call.1']
    #allocation10 [shape = 'u8[262144]{0}', space=vmem, size = 0x40000, scoped, tag = 'output window, operand 0']
    %10 = vsyncpa [#allocation3], 0
    %s11 = scalar_lea.sflag [#allocation3], 1
    %12 = vsyncpa %s11, 0
    %13 = vsyncpa [#allocation6], 0
    %14 = vsyncpa [#allocation9], 0
    %s15 = scalar_lea.sflag [#allocation9], 1
    %16 = vsyncpa %s15, 0
    %17 = vsyncpa [#allocation4], 0
    %s18 = scalar_lea.sflag [#allocation4], 1
    %19 = vsyncpa %s18, 0
    loop: start=0, step=1, limit=8
    $region2: #{tpu_custom_call.1} parent=1 // loop_pre_header
      _
    $region3: #{tpu_custom_call.1} parent=1 // loop_header
      %s21 = sphi 0, %s25
      %p22 = scmp.ge.s32.totalorder %s21, 8
      %s28 = sphi 0, %s40
      %s29 = sphi 0, %s36
      %s30 = sphi 0, %s28
      %s31 = sphi 0, %s29
      %s32 = sphi 0, %s30
      %s33 = sphi 0, %s31
      %s43 = sphi 0, %s45
      %s46 = sphi 0, %s43
      %s47 = sphi 0, %s46
      %s63 = sphi 0, %s47
      %s67 = sphi 0, %s67
      %s69 = sphi 0, %s67
      %s70 = sphi 0, %s69
      %s84 = sphi 0, %s70
      %s88 = sphi 0, %s88
      %s90 = sphi 0, %s88
      %s91 = sphi 0, %s90
      %s105 = sphi 0, %s91
      %s111 = sphi 0, %s113
      %s114 = sphi 0, %s111
      %s115 = sphi 0, %s114
      %s131 = sphi 0, %s115
      %s137 = sphi 0, %s139
      %s140 = sphi 0, %s137
      %s141 = sphi 0, %s140
      %s157 = sphi 0, %s141
      %s165 = sphi 0, %s167
      %s168 = sphi 0, %s165
      %s169 = sphi 0, %s168
      %s185 = sphi 0, %s169
    $region4: #{tpu_custom_call.1} parent=1 // loop_header_branch
      %24 = sbr.rel (%p22) target = $region8
    $region5: #{tpu_custom_call.1} parent=1 // loop_body
      %s26 = ssub.s32 %s21, 1
      %s27 = ssub.s32 %s21, 2
      %s34 = sadd.s32 1, %s29
      %p35 = scmp.ge.s32.totalorder %s34, 3
      %s36 = scalar_select %p35, 0, %s34
      %s37 = sadd.s32 1, %s28
      %s38 = scalar_select %p35, %s37, %s28
      %p39 = scmp.ge.s32.totalorder %s38, 2
      %s40 = scalar_select %p39, 0, %s38
      %s41 = ssub.s32 %s28, %s40
      %p42 = scmp.eq.s32.totalorder %s41, 0
      %s44 = sadd.s32 %s43, 1
      %s45 = scalar_select %p42, %s43, %s44
      %p48 = pneg %p42
      %p49 = scmp.eq.s32.totalorder %s21, 5
      %p50 = por %p48, %p49
      %p51 = scmp.ne.s32.totalorder %s43, %s46
      %p52 = scmp.eq.s32.totalorder %s21, 0
      %p53 = por %p51, %p52
      %p54 = scmp.ne.s32.totalorder %s43, %s46
      %p55 = scmp.eq.s32.totalorder %s26, 5
      %p56 = por %p54, %p55
      %p57 = scmp.ne.s32.totalorder %s46, %s47
      %p58 = scmp.eq.s32.totalorder %s26, 0
      %p59 = por %p57, %p58
      %p60 = scmp.ne.s32.totalorder %s46, %s47
      %p61 = scmp.eq.s32.totalorder %s27, 5
      %p62 = por %p60, %p61
      %p64 = scmp.ne.s32.totalorder %s47, %s63
      %p65 = scmp.eq.s32.totalorder %s27, 0
      %p66 = por %p64, %p65
      %s68 = sadd.s32 %s67, 1
      %p71 = scmp.eq.s32.totalorder %s21, 5
      %p72 = scmp.ne.s32.totalorder %s67, %s69
      %p73 = scmp.eq.s32.totalorder %s21, 0
      %p74 = por %p72, %p73
      %p75 = scmp.ne.s32.totalorder %s67, %s69
      %p76 = scmp.eq.s32.totalorder %s26, 5
      %p77 = por %p75, %p76
      %p78 = scmp.ne.s32.totalorder %s69, %s70
      %p79 = scmp.eq.s32.totalorder %s26, 0
      %p80 = por %p78, %p79
      %p81 = scmp.ne.s32.totalorder %s69, %s70
      %p82 = scmp.eq.s32.totalorder %s27, 5
      %p83 = por %p81, %p82
      %p85 = scmp.ne.s32.totalorder %s70, %s84
      %p86 = scmp.eq.s32.totalorder %s27, 0
      %p87 = por %p85, %p86
      %s89 = sadd.s32 %s88, 1
      %p92 = scmp.eq.s32.totalorder %s21, 5
      %p93 = scmp.ne.s32.totalorder %s88, %s90
      %p94 = scmp.eq.s32.totalorder %s21, 0
      %p95 = por %p93, %p94
      %p96 = scmp.ne.s32.totalorder %s88, %s90
      %p97 = scmp.eq.s32.totalorder %s26, 5
      %p98 = por %p96, %p97
      %p99 = scmp.ne.s32.totalorder %s90, %s91
      %p100 = scmp.eq.s32.totalorder %s26, 0
      %p101 = por %p99, %p100
      %p102 = scmp.ne.s32.totalorder %s90, %s91
      %p103 = scmp.eq.s32.totalorder %s27, 5
      %p104 = por %p102, %p103
      %p106 = scmp.ne.s32.totalorder %s91, %s105
      %p107 = scmp.eq.s32.totalorder %s27, 0
      %p108 = por %p106, %p107
      %s109 = ssub.s32 %s29, %s36
      %p110 = scmp.eq.s32.totalorder %s109, 0
      %s112 = sadd.s32 %s111, 1
      %s113 = scalar_select %p110, %s111, %s112
      %p116 = pneg %p110
      %p117 = scmp.eq.s32.totalorder %s21, 5
      %p118 = por %p116, %p117
      %p119 = scmp.ne.s32.totalorder %s111, %s114
      %p120 = scmp.eq.s32.totalorder %s21, 0
      %p121 = por %p119, %p120
      %p122 = scmp.ne.s32.totalorder %s111, %s114
      %p123 = scmp.eq.s32.totalorder %s26, 5
      %p124 = por %p122, %p123
      %p125 = scmp.ne.s32.totalorder %s114, %s115
      %p126 = scmp.eq.s32.totalorder %s26, 0
      %p127 = por %p125, %p126
      %p128 = scmp.ne.s32.totalorder %s114, %s115
      %p129 = scmp.eq.s32.totalorder %s27, 5
      %p130 = por %p128, %p129
      %p132 = scmp.ne.s32.totalorder %s115, %s131
      %p133 = scmp.eq.s32.totalorder %s27, 0
      %p134 = por %p132, %p133
      %s135 = ssub.s32 %s29, %s36
      %p136 = scmp.eq.s32.totalorder %s135, 0
      %s138 = sadd.s32 %s137, 1
      %s139 = scalar_select %p136, %s137, %s138
      %p142 = pneg %p136
      %p143 = scmp.eq.s32.totalorder %s21, 5
      %p144 = por %p142, %p143
      %p145 = scmp.ne.s32.totalorder %s137, %s140
      %p146 = scmp.eq.s32.totalorder %s21, 0
      %p147 = por %p145, %p146
      %p148 = scmp.ne.s32.totalorder %s137, %s140
      %p149 = scmp.eq.s32.totalorder %s26, 5
      %p150 = por %p148, %p149
      %p151 = scmp.ne.s32.totalorder %s140, %s141
      %p152 = scmp.eq.s32.totalorder %s26, 0
      %p153 = por %p151, %p152
      %p154 = scmp.ne.s32.totalorder %s140, %s141
      %p155 = scmp.eq.s32.totalorder %s27, 5
      %p156 = por %p154, %p155
      %p158 = scmp.ne.s32.totalorder %s141, %s157
      %p159 = scmp.eq.s32.totalorder %s27, 0
      %p160 = por %p158, %p159
      %s161 = ssub.s32 %s28, %s40
      %s162 = ssub.s32 %s29, %s36
      %s163 = sor.u32 %s161, %s162
      %p164 = scmp.eq.s32.totalorder %s163, 0
      %s166 = sadd.s32 %s165, 1
      %s167 = scalar_select %p164, %s165, %s166
      %p170 = pneg %p164
      %p171 = scmp.eq.s32.totalorder %s21, 5
      %p172 = por %p170, %p171
      %p173 = scmp.ne.s32.totalorder %s165, %s168
      %p174 = scmp.eq.s32.totalorder %s21, 0
      %p175 = por %p173, %p174
      %p176 = scmp.ne.s32.totalorder %s165, %s168
      %p177 = scmp.eq.s32.totalorder %s26, 5
      %p178 = por %p176, %p177
      %p179 = scmp.ne.s32.totalorder %s168, %s169
      %p180 = scmp.eq.s32.totalorder %s26, 0
      %p181 = por %p179, %p180
      %p182 = scmp.ne.s32.totalorder %s168, %s169
      %p183 = scmp.eq.s32.totalorder %s27, 5
      %p184 = por %p182, %p183
      %p186 = scmp.ne.s32.totalorder %s169, %s185
      %p187 = scmp.eq.s32.totalorder %s27, 0
      %p188 = por %p186, %p187
      %p189 = scmp.le.s32.totalorder 1, %s21
      %p190 = scmp.lt.s32.totalorder %s21, 7
      %p191 = pnand %p189, %p190
      %p192 = pneg %p191
      // Predicated region
      $region9: #{tpu_custom_call.1} parent=5 // pred_check
        _
      $region10: #{tpu_custom_call.1} parent=5 // pred_check_branch
        %194 = sbr.rel (%p191) target = $region12
      $region11: #{tpu_custom_call.1} parent=5 // pred_region
        %s195 = ssub.s32 %s21, 1
        // Predicated region
        $region13: #{tpu_custom_call.1} parent=11 // pred_check
          %p196 = pneg %p80
        $region14: #{tpu_custom_call.1} parent=11 // pred_check_branch
          %198 = sbr.rel (%p196) target = $region16
        $region15: #{tpu_custom_call.1} parent=11 // pred_region
          %s200 = ssub.s32 32, 32
          %201 = vsyncadd [#allocation6], %s200
          %s203 = sshll.u32 [#allocation5], 4
          %s204 = int_to_ptr.vmem [resolvable:$true] %s203
          %206 = dma.hbm_to_vmem [thread:$0]  %s1, 32, %s204, [#allocation6]
        $region16: #{tpu_custom_call.1} parent=11 // pred_fallthru
          _
        // Predicated region
        $region17: #{tpu_custom_call.1} parent=11 // pred_check
          %p207 = pneg %p101
        $region18: #{tpu_custom_call.1} parent=11 // pred_check_branch
          %209 = sbr.rel (%p207) target = $region20
        $region19: #{tpu_custom_call.1} parent=11 // pred_region
          %s211 = ssub.s32 32, 32
          %212 = vsyncadd [#allocation6], %s211
          %s214 = sshll.u32 [#allocation7], 4
          %s215 = int_to_ptr.vmem [resolvable:$true] %s214
          %217 = dma.hbm_to_vmem [thread:$0]  %s2, 32, %s215, [#allocation6]
        $region20: #{tpu_custom_call.1} parent=11 // pred_fallthru
          _
      $region12: #{tpu_custom_call.1} parent=5 // pred_fallthru
        _
      %p218 = scmp.lt.s32.totalorder %s21, 6
      // Predicated region
      $region21: #{tpu_custom_call.1} parent=5 // pred_check
        %p219 = pneg %p218
      $region22: #{tpu_custom_call.1} parent=5 // pred_check_branch
        %221 = sbr.rel (%p219) target = $region24
      $region23: #{tpu_custom_call.1} parent=5 // pred_region
        // Predicated region
        $region25: #{tpu_custom_call.1} parent=23 // pred_check
          %p222 = pneg %p53
        $region26: #{tpu_custom_call.1} parent=23 // pred_check_branch
          %224 = sbr.rel (%p222) target = $region28
        $region27: #{tpu_custom_call.1} parent=23 // pred_region
          %s225 = sand.u32 %s43, 1
          %s226 = scalar_lea.sflag [#allocation3], %s225
          %s227 = sand.u32 %s43, 1
          %s228 = smul.addr %s227, 512
          %s229 = scalar_lea.vmem [#allocation2], %s228
          %s230 = smul.u32 32, %s28
          %s232 = ssub.s32 8192, 8192
          %233 = vsyncadd %s226, %s232
          %s234 = smul.addr %s230, 2
          %s235 = smul.addr %s234, 128
          %s236 = scalar_lea.hbm %s0, %s235
          %s237 = sshll.u32 %s229, 4
          %s238 = int_to_ptr.vmem [resolvable:$true] %s237
          %243 = dma.hbm_to_vmem [thread:$0]  %s236, 8192, %s238, %s226, 256, 256, 16
        $region28: #{tpu_custom_call.1} parent=23 // pred_fallthru
          _
        // Predicated region
        $region29: #{tpu_custom_call.1} parent=23 // pred_check
          %p244 = pneg %p121
        $region30: #{tpu_custom_call.1} parent=23 // pred_check_branch
          %246 = sbr.rel (%p244) target = $region32
        $region31: #{tpu_custom_call.1} parent=23 // pred_region
          %s247 = sand.u32 %s111, 1
          %s248 = scalar_lea.sflag [#allocation9], %s247
          %s249 = sand.u32 %s111, 1
          %s250 = smul.addr %s249, 256
          %s251 = scalar_lea.vmem [#allocation8], %s250
          %s252 = smul.u32 2, %s29
          %s254 = ssub.s32 4096, 4096
          %255 = vsyncadd %s248, %s254
          %s256 = smul.addr %s252, 64
          %s257 = scalar_lea.hbm %s3, %s256
          %s258 = sshll.u32 %s251, 4
          %s259 = int_to_ptr.vmem [resolvable:$true] %s258
          %264 = dma.hbm_to_vmem [thread:$0]  %s257, 4096, %s259, %s248, 384, 128, 8
        $region32: #{tpu_custom_call.1} parent=23 // pred_fallthru
          _
        // Predicated region
        $region33: #{tpu_custom_call.1} parent=23 // pred_check
          %p265 = pneg %p147
        $region34: #{tpu_custom_call.1} parent=23 // pred_check_branch
          %267 = sbr.rel (%p265) target = $region36
        $region35: #{tpu_custom_call.1} parent=23 // pred_region
          %s268 = smul.u32 2, %s29
          %p269 = scmp.lt.s32.totalorder %s268, 5
          %s270 = scalar_select %p269, %s268, 5
          %s271 = scalar_lea.vmem %s4, %s270
          %s272 = smul.u32 2, %s29
        $region36: #{tpu_custom_call.1} parent=23 // pred_fallthru
          _
      $region24: #{tpu_custom_call.1} parent=5 // pred_fallthru
        _
      %p273 = scmp.le.s32.totalorder 1, %s21
      %p274 = scmp.lt.s32.totalorder %s21, 7
      %p275 = pnand %p273, %p274
      %p276 = pneg %p275
      // Predicated region
      $region37: #{tpu_custom_call.1} parent=5 // pred_check
        _
      $region38: #{tpu_custom_call.1} parent=5 // pred_check_branch
        %278 = sbr.rel (%p275) target = $region40
      $region39: #{tpu_custom_call.1} parent=5 // pred_region
        %s279 = ssub.s32 %s21, 1
        %s280 = sand.u32 %s46, 1
        %s281 = scalar_lea.sflag [#allocation3], %s280
        %s282 = sand.u32 %s46, 1
        %s283 = smul.addr %s282, 512
        %s284 = scalar_lea.vmem [#allocation2], %s283
        // Predicated region
        $region41: #{tpu_custom_call.1} parent=39 // pred_check
          %p285 = pneg %p59
        $region42: #{tpu_custom_call.1} parent=39 // pred_check_branch
          %287 = sbr.rel (%p285) target = $region44
        $region43: #{tpu_custom_call.1} parent=39 // pred_region
          %288 = dma.done %s281, 8192
        $region44: #{tpu_custom_call.1} parent=39 // pred_fallthru
          _
        // Predicated region
        $region45: #{tpu_custom_call.1} parent=39 // pred_check
          %p289 = pneg %p80
        $region46: #{tpu_custom_call.1} parent=39 // pred_check_branch
          %291 = sbr.rel (%p289) target = $region48
        $region47: #{tpu_custom_call.1} parent=39 // pred_region
          %292 = dma.done [#allocation6], 32
        $region48: #{tpu_custom_call.1} parent=39 // pred_fallthru
          _
        // Predicated region
        $region49: #{tpu_custom_call.1} parent=39 // pred_check
          %p293 = pneg %p101
        $region50: #{tpu_custom_call.1} parent=39 // pred_check_branch
          %295 = sbr.rel (%p293) target = $region52
        $region51: #{tpu_custom_call.1} parent=39 // pred_region
          %296 = dma.done [#allocation6], 32
        $region52: #{tpu_custom_call.1} parent=39 // pred_fallthru
          _
        %s297 = sand.u32 %s114, 1
        %s298 = scalar_lea.sflag [#allocation9], %s297
        %s299 = sand.u32 %s114, 1
        %s300 = smul.addr %s299, 256
        %s301 = scalar_lea.vmem [#allocation8], %s300
        // Predicated region
        $region53: #{tpu_custom_call.1} parent=39 // pred_check
          %p302 = pneg %p127
        $region54: #{tpu_custom_call.1} parent=39 // pred_check_branch
          %304 = sbr.rel (%p302) target = $region56
        $region55: #{tpu_custom_call.1} parent=39 // pred_region
          %305 = dma.done %s298, 4096
        $region56: #{tpu_custom_call.1} parent=39 // pred_fallthru
          _
        %s306 = sand.u32 %s46, 1
        %s307 = scalar_lea.sflag [#allocation3], %s306
        %s308 = sand.u32 %s46, 1
        %s309 = smul.addr %s308, 512
        %s310 = scalar_lea.vmem [#allocation2], %s309
        %p311 = pneg %p59
        %p312 = pneg %p56
        %p313 = pneg %p80
        %p314 = pneg %p77
        %p315 = pneg %p101
        %p316 = pneg %p98
        %s317 = sand.u32 %s114, 1
        %s318 = scalar_lea.sflag [#allocation9], %s317
        %s319 = sand.u32 %s114, 1
        %s320 = smul.addr %s319, 256
        %s321 = scalar_lea.vmem [#allocation8], %s320
        %p322 = pneg %p127
        %p323 = pneg %p124
        %s324 = smul.u32 2, %s31
        %p325 = scmp.lt.s32.totalorder %s324, 5
        %s326 = scalar_select %p325, %s324, 5
        %s327 = scalar_lea.vmem %s4, %s326
        %p328 = pneg %p153
        %p329 = pneg %p150
        %p330 = pneg %p181
        %p331 = pneg %p178
        %s332 = sand.u32 %s168, 1
        %s333 = scalar_lea.sflag [#allocation4], %s332
        %s334 = sand.u32 %s168, 1
        %s335 = smul.addr %s334, 256
        %s336 = scalar_lea.vmem [#allocation10], %s335
        %s337 = smul.u32 32, %s30
        %s338 = smul.u32 2, %s31
        %s339 = smul.u32 2, %s31
        %p340 = scmp.lt.s32.totalorder %s339, 5
        %s341 = scalar_select %p340, %s339, 5
        %s342 = scalar_lea.vmem %s4, %s341
        %s343 = smul.u32 2, %s31
        %s344 = smul.u32 32, %s30
        %s345 = smul.u32 2, %s31
        %v346 = vld [vmem:[%s284] sm:$0xff]
        %v347 = vld [vmem:[%s284 + $0x8] sm:$0xff]
        %v348 = vld [vmem:[%s284 + $0x10] sm:$0xff]
        %v349 = vld [vmem:[%s284 + $0x18] sm:$0xff]
        %v350 = vld [vmem:[%s284 + $0x20] sm:$0xff]
        %v351 = vld [vmem:[%s284 + $0x28] sm:$0xff]
        %v352 = vld [vmem:[%s284 + $0x30] sm:$0xff]
        %v353 = vld [vmem:[%s284 + $0x38] sm:$0xff]
        %v354 = vld [vmem:[%s284 + $0x40] sm:$0xff]
        %v355 = vld [vmem:[%s284 + $0x48] sm:$0xff]
        %v356 = vld [vmem:[%s284 + $0x50] sm:$0xff]
        %v357 = vld [vmem:[%s284 + $0x58] sm:$0xff]
        %v358 = vld [vmem:[%s284 + $0x60] sm:$0xff]
        %v359 = vld [vmem:[%s284 + $0x68] sm:$0xff]
        %v360 = vld [vmem:[%s284 + $0x70] sm:$0xff]
        %v361 = vld [vmem:[%s284 + $0x78] sm:$0xff]
        %v362 = vld [vmem:[%s284 + $0x80] sm:$0xff]
        %v363 = vld [vmem:[%s284 + $0x88] sm:$0xff]
        %v364 = vld [vmem:[%s284 + $0x90] sm:$0xff]
        %v365 = vld [vmem:[%s284 + $0x98] sm:$0xff]
        %v366 = vld [vmem:[%s284 + $0xa0] sm:$0xff]
        %v367 = vld [vmem:[%s284 + $0xa8] sm:$0xff]
        %v368 = vld [vmem:[%s284 + $0xb0] sm:$0xff]
        %v369 = vld [vmem:[%s284 + $0xb8] sm:$0xff]
        %v370 = vld [vmem:[%s284 + $0xc0] sm:$0xff]
        %v371 = vld [vmem:[%s284 + $0xc8] sm:$0xff]
        %v372 = vld [vmem:[%s284 + $0xd0] sm:$0xff]
        %v373 = vld [vmem:[%s284 + $0xd8] sm:$0xff]
        %v374 = vld [vmem:[%s284 + $0xe0] sm:$0xff]
        %v375 = vld [vmem:[%s284 + $0xe8] sm:$0xff]
        %v376 = vld [vmem:[%s284 + $0xf0] sm:$0xff]
        %v377 = vld [vmem:[%s284 + $0xf8] sm:$0xff]
        %v378 = vld [vmem:[%s284 + $0x100] sm:$0xff]
        %v379 = vld [vmem:[%s284 + $0x108] sm:$0xff]
        %v380 = vld [vmem:[%s284 + $0x110] sm:$0xff]
        %v381 = vld [vmem:[%s284 + $0x118] sm:$0xff]
        %v382 = vld [vmem:[%s284 + $0x120] sm:$0xff]
        %v383 = vld [vmem:[%s284 + $0x128] sm:$0xff]
        %v384 = vld [vmem:[%s284 + $0x130] sm:$0xff]
        %v385 = vld [vmem:[%s284 + $0x138] sm:$0xff]
        %v386 = vld [vmem:[%s284 + $0x140] sm:$0xff]
        %v387 = vld [vmem:[%s284 + $0x148] sm:$0xff]
        %v388 = vld [vmem:[%s284 + $0x150] sm:$0xff]
        %v389 = vld [vmem:[%s284 + $0x158] sm:$0xff]
        %v390 = vld [vmem:[%s284 + $0x160] sm:$0xff]
        %v391 = vld [vmem:[%s284 + $0x168] sm:$0xff]
        %v392 = vld [vmem:[%s284 + $0x170] sm:$0xff]
        %v393 = vld [vmem:[%s284 + $0x178] sm:$0xff]
        %v394 = vld [vmem:[%s284 + $0x180] sm:$0xff]
        %v395 = vld [vmem:[%s284 + $0x188] sm:$0xff]
        %v396 = vld [vmem:[%s284 + $0x190] sm:$0xff]
        %v397 = vld [vmem:[%s284 + $0x198] sm:$0xff]
        %v398 = vld [vmem:[%s284 + $0x1a0] sm:$0xff]
        %v399 = vld [vmem:[%s284 + $0x1a8] sm:$0xff]
        %v400 = vld [vmem:[%s284 + $0x1b0] sm:$0xff]
        %v401 = vld [vmem:[%s284 + $0x1b8] sm:$0xff]
        %v402 = vld [vmem:[%s284 + $0x1c0] sm:$0xff]
        %v403 = vld [vmem:[%s284 + $0x1c8] sm:$0xff]
        %v404 = vld [vmem:[%s284 + $0x1d0] sm:$0xff]
        %v405 = vld [vmem:[%s284 + $0x1d8] sm:$0xff]
        %v406 = vld [vmem:[%s284 + $0x1e0] sm:$0xff]
        %v407 = vld [vmem:[%s284 + $0x1e8] sm:$0xff]
        %v408 = vld [vmem:[%s284 + $0x1f0] sm:$0xff]
        %v409 = vld [vmem:[%s284 + $0x1f8] sm:$0xff]
        %v410 = vadd.f32 %v346, %v347
        %411 = vadd.xlane.f32.xlu0 %v410
        %v412 = vpop.xlane.xlu0 %411
        %v413 = vadd.f32 %v348, %v349
        %414 = vadd.xlane.f32.xlu0 %v413
        %v415 = vpop.xlane.xlu0 %414
        %v416 = vadd.f32 %v350, %v351
        %417 = vadd.xlane.f32.xlu0 %v416
        %v418 = vpop.xlane.xlu0 %417
        %v419 = vadd.f32 %v352, %v353
        %420 = vadd.xlane.f32.xlu0 %v419
        %v421 = vpop.xlane.xlu0 %420
        %v422 = vadd.f32 %v354, %v355
        %423 = vadd.xlane.f32.xlu0 %v422
        %v424 = vpop.xlane.xlu0 %423
        %v425 = vadd.f32 %v356, %v357
        %426 = vadd.xlane.f32.xlu0 %v425
        %v427 = vpop.xlane.xlu0 %426
        %v428 = vadd.f32 %v358, %v359
        %429 = vadd.xlane.f32.xlu0 %v428
        %v430 = vpop.xlane.xlu0 %429
        %v431 = vadd.f32 %v360, %v361
        %432 = vadd.xlane.f32.xlu0 %v431
        %v433 = vpop.xlane.xlu0 %432
        %v434 = vadd.f32 %v362, %v363
        %435 = vadd.xlane.f32.xlu0 %v434
        %v436 = vpop.xlane.xlu0 %435
        %v437 = vadd.f32 %v364, %v365
        %438 = vadd.xlane.f32.xlu0 %v437
        %v439 = vpop.xlane.xlu0 %438
        %v440 = vadd.f32 %v366, %v367
        %441 = vadd.xlane.f32.xlu0 %v440
        %v442 = vpop.xlane.xlu0 %441
        %v443 = vadd.f32 %v368, %v369
        %444 = vadd.xlane.f32.xlu0 %v443
        %v445 = vpop.xlane.xlu0 %444
        %v446 = vadd.f32 %v370, %v371
        %447 = vadd.xlane.f32.xlu0 %v446
        %v448 = vpop.xlane.xlu0 %447
        %v449 = vadd.f32 %v372, %v373
        %450 = vadd.xlane.f32.xlu0 %v449
        %v451 = vpop.xlane.xlu0 %450
        %v452 = vadd.f32 %v374, %v375
        %453 = vadd.xlane.f32.xlu0 %v452
        %v454 = vpop.xlane.xlu0 %453
        %v455 = vadd.f32 %v376, %v377
        %456 = vadd.xlane.f32.xlu0 %v455
        %v457 = vpop.xlane.xlu0 %456
        %v458 = vadd.f32 %v378, %v379
        %459 = vadd.xlane.f32.xlu0 %v458
        %v460 = vpop.xlane.xlu0 %459
        %v461 = vadd.f32 %v380, %v381
        %462 = vadd.xlane.f32.xlu0 %v461
        %v463 = vpop.xlane.xlu0 %462
        %v464 = vadd.f32 %v382, %v383
        %465 = vadd.xlane.f32.xlu0 %v464
        %v466 = vpop.xlane.xlu0 %465
        %v467 = vadd.f32 %v384, %v385
        %468 = vadd.xlane.f32.xlu0 %v467
        %v469 = vpop.xlane.xlu0 %468
        %v470 = vadd.f32 %v386, %v387
        %471 = vadd.xlane.f32.xlu0 %v470
        %v472 = vpop.xlane.xlu0 %471
        %v473 = vadd.f32 %v388, %v389
        %474 = vadd.xlane.f32.xlu0 %v473
        %v475 = vpop.xlane.xlu0 %474
        %v476 = vadd.f32 %v390, %v391
        %477 = vadd.xlane.f32.xlu0 %v476
        %v478 = vpop.xlane.xlu0 %477
        %v479 = vadd.f32 %v392, %v393
        %480 = vadd.xlane.f32.xlu0 %v479
        %v481 = vpop.xlane.xlu0 %480
        %v482 = vadd.f32 %v394, %v395
        %483 = vadd.xlane.f32.xlu0 %v482
        %v484 = vpop.xlane.xlu0 %483
        %v485 = vadd.f32 %v396, %v397
        %486 = vadd.xlane.f32.xlu0 %v485
        %v487 = vpop.xlane.xlu0 %486
        %v488 = vadd.f32 %v398, %v399
        %489 = vadd.xlane.f32.xlu0 %v488
        %v490 = vpop.xlane.xlu0 %489
        %v491 = vadd.f32 %v400, %v401
        %492 = vadd.xlane.f32.xlu0 %v491
        %v493 = vpop.xlane.xlu0 %492
        %v494 = vadd.f32 %v402, %v403
        %495 = vadd.xlane.f32.xlu0 %v494
        %v496 = vpop.xlane.xlu0 %495
        %v497 = vadd.f32 %v404, %v405
        %498 = vadd.xlane.f32.xlu0 %v497
        %v499 = vpop.xlane.xlu0 %498
        %v500 = vadd.f32 %v406, %v407
        %501 = vadd.xlane.f32.xlu0 %v500
        %v502 = vpop.xlane.xlu0 %501
        %v503 = vadd.f32 %v408, %v409
        %504 = vadd.xlane.f32.xlu0 %v503
        %v505 = vpop.xlane.xlu0 %504
        %v506 = vrcp.pop 256.0
        %v507 = vmul.f32 %v412, %v506
        %v508 = vmul.f32 %v415, %v506
        %v509 = vmul.f32 %v418, %v506
        %v510 = vmul.f32 %v421, %v506
        %v511 = vmul.f32 %v424, %v506
        %v512 = vmul.f32 %v427, %v506
        %v513 = vmul.f32 %v430, %v506
        %v514 = vmul.f32 %v433, %v506
        %v515 = vmul.f32 %v436, %v506
        %v516 = vmul.f32 %v439, %v506
        %v517 = vmul.f32 %v442, %v506
        %v518 = vmul.f32 %v445, %v506
        %v519 = vmul.f32 %v448, %v506
        %v520 = vmul.f32 %v451, %v506
        %v521 = vmul.f32 %v454, %v506
        %v522 = vmul.f32 %v457, %v506
        %v523 = vmul.f32 %v460, %v506
        %v524 = vmul.f32 %v463, %v506
        %v525 = vmul.f32 %v466, %v506
        %v526 = vmul.f32 %v469, %v506
        %v527 = vmul.f32 %v472, %v506
        %v528 = vmul.f32 %v475, %v506
        %v529 = vmul.f32 %v478, %v506
        %v530 = vmul.f32 %v481, %v506
        %v531 = vmul.f32 %v484, %v506
        %v532 = vmul.f32 %v487, %v506
        %v533 = vmul.f32 %v490, %v506
        %v534 = vmul.f32 %v493, %v506
        %v535 = vmul.f32 %v496, %v506
        %v536 = vmul.f32 %v499, %v506
        %v537 = vmul.f32 %v502, %v506
        %v538 = vmul.f32 %v505, %v506
        %v539 = vsub.f32 %v346, %v507
        %v540 = vsub.f32 %v347, %v507
        %v541 = vsub.f32 %v348, %v508
        %v542 = vsub.f32 %v349, %v508
        %v543 = vsub.f32 %v350, %v509
        %v544 = vsub.f32 %v351, %v509
        %v545 = vsub.f32 %v352, %v510
        %v546 = vsub.f32 %v353, %v510
        %v547 = vsub.f32 %v354, %v511
        %v548 = vsub.f32 %v355, %v511
        %v549 = vsub.f32 %v356, %v512
        %v550 = vsub.f32 %v357, %v512
        %v551 = vsub.f32 %v358, %v513
        %v552 = vsub.f32 %v359, %v513
        %v553 = vsub.f32 %v360, %v514
        %v554 = vsub.f32 %v361, %v514
        %v555 = vsub.f32 %v362, %v515
        %v556 = vsub.f32 %v363, %v515
        %v557 = vsub.f32 %v364, %v516
        %v558 = vsub.f32 %v365, %v516
        %v559 = vsub.f32 %v366, %v517
        %v560 = vsub.f32 %v367, %v517
        %v561 = vsub.f32 %v368, %v518
        %v562 = vsub.f32 %v369, %v518
        %v563 = vsub.f32 %v370, %v519
        %v564 = vsub.f32 %v371, %v519
        %v565 = vsub.f32 %v372, %v520
        %v566 = vsub.f32 %v373, %v520
        %v567 = vsub.f32 %v374, %v521
        %v568 = vsub.f32 %v375, %v521
        %v569 = vsub.f32 %v376, %v522
        %v570 = vsub.f32 %v377, %v522
        %v571 = vsub.f32 %v378, %v523
        %v572 = vsub.f32 %v379, %v523
        %v573 = vsub.f32 %v380, %v524
        %v574 = vsub.f32 %v381, %v524
        %v575 = vsub.f32 %v382, %v525
        %v576 = vsub.f32 %v383, %v525
        %v577 = vsub.f32 %v384, %v526
        %v578 = vsub.f32 %v385, %v526
        %v579 = vsub.f32 %v386, %v527
        %v580 = vsub.f32 %v387, %v527
        %v581 = vsub.f32 %v388, %v528
        %v582 = vsub.f32 %v389, %v528
        %v583 = vsub.f32 %v390, %v529
        %v584 = vsub.f32 %v391, %v529
        %v585 = vsub.f32 %v392, %v530
        %v586 = vsub.f32 %v393, %v530
        %v587 = vsub.f32 %v394, %v531
        %v588 = vsub.f32 %v395, %v531
        %v589 = vsub.f32 %v396, %v532
        %v590 = vsub.f32 %v397, %v532
        %v591 = vsub.f32 %v398, %v533
        %v592 = vsub.f32 %v399, %v533
        %v593 = vsub.f32 %v400, %v534
        %v594 = vsub.f32 %v401, %v534
        %v595 = vsub.f32 %v402, %v535
        %v596 = vsub.f32 %v403, %v535
        %v597 = vsub.f32 %v404, %v536
        %v598 = vsub.f32 %v405, %v536
        %v599 = vsub.f32 %v406, %v537
        %v600 = vsub.f32 %v407, %v537
        %v601 = vsub.f32 %v408, %v538
        %v602 = vsub.f32 %v409, %v538
        %v603 = vmul.f32 %v539, %v539
        %v604 = vmul.f32 %v540, %v540
        %v605 = vmul.f32 %v541, %v541
        %v606 = vmul.f32 %v542, %v542
        %v607 = vmul.f32 %v543, %v543
        %v608 = vmul.f32 %v544, %v544
        %v609 = vmul.f32 %v545, %v545
        %v610 = vmul.f32 %v546, %v546
        %v611 = vmul.f32 %v547, %v547
        %v612 = vmul.f32 %v548, %v548
        %v613 = vmul.f32 %v549, %v549
        %v614 = vmul.f32 %v550, %v550
        %v615 = vmul.f32 %v551, %v551
        %v616 = vmul.f32 %v552, %v552
        %v617 = vmul.f32 %v553, %v553
        %v618 = vmul.f32 %v554, %v554
        %v619 = vmul.f32 %v555, %v555
        %v620 = vmul.f32 %v556, %v556
        %v621 = vmul.f32 %v557, %v557
        %v622 = vmul.f32 %v558, %v558
        %v623 = vmul.f32 %v559, %v559
        %v624 = vmul.f32 %v560, %v560
        %v625 = vmul.f32 %v561, %v561
        %v626 = vmul.f32 %v562, %v562
        %v627 = vmul.f32 %v563, %v563
        %v628 = vmul.f32 %v564, %v564
        %v629 = vmul.f32 %v565, %v565
        %v630 = vmul.f32 %v566, %v566
        %v631 = vmul.f32 %v567, %v567
        %v632 = vmul.f32 %v568, %v568
        %v633 = vmul.f32 %v569, %v569
        %v634 = vmul.f32 %v570, %v570
        %v635 = vmul.f32 %v571, %v571
        %v636 = vmul.f32 %v572, %v572
        %v637 = vmul.f32 %v573, %v573
        %v638 = vmul.f32 %v574, %v574
        %v639 = vmul.f32 %v575, %v575
        %v640 = vmul.f32 %v576, %v576
        %v641 = vmul.f32 %v577, %v577
        %v642 = vmul.f32 %v578, %v578
        %v643 = vmul.f32 %v579, %v579
        %v644 = vmul.f32 %v580, %v580
        %v645 = vmul.f32 %v581, %v581
        %v646 = vmul.f32 %v582, %v582
        %v647 = vmul.f32 %v583, %v583
        %v648 = vmul.f32 %v584, %v584
        %v649 = vmul.f32 %v585, %v585
        %v650 = vmul.f32 %v586, %v586
        %v651 = vmul.f32 %v587, %v587
        %v652 = vmul.f32 %v588, %v588
        %v653 = vmul.f32 %v589, %v589
        %v654 = vmul.f32 %v590, %v590
        %v655 = vmul.f32 %v591, %v591
        %v656 = vmul.f32 %v592, %v592
        %v657 = vmul.f32 %v593, %v593
        %v658 = vmul.f32 %v594, %v594
        %v659 = vmul.f32 %v595, %v595
        %v660 = vmul.f32 %v596, %v596
        %v661 = vmul.f32 %v597, %v597
        %v662 = vmul.f32 %v598, %v598
        %v663 = vmul.f32 %v599, %v599
        %v664 = vmul.f32 %v600, %v600
        %v665 = vmul.f32 %v601, %v601
        %v666 = vmul.f32 %v602, %v602
        %v667 = vadd.f32 %v603, %v604
        %668 = vadd.xlane.f32.xlu0 %v667
        %v669 = vpop.xlane.xlu0 %668
        %v670 = vadd.f32 %v605, %v606
        %671 = vadd.xlane.f32.xlu0 %v670
        %v672 = vpop.xlane.xlu0 %671
        %v673 = vadd.f32 %v607, %v608
        %674 = vadd.xlane.f32.xlu0 %v673
        %v675 = vpop.xlane.xlu0 %674
        %v676 = vadd.f32 %v609, %v610
        %677 = vadd.xlane.f32.xlu0 %v676
        %v678 = vpop.xlane.xlu0 %677
        %v679 = vadd.f32 %v611, %v612
        %680 = vadd.xlane.f32.xlu0 %v679
        %v681 = vpop.xlane.xlu0 %680
        %v682 = vadd.f32 %v613, %v614
        %683 = vadd.xlane.f32.xlu0 %v682
        %v684 = vpop.xlane.xlu0 %683
        %v685 = vadd.f32 %v615, %v616
        %686 = vadd.xlane.f32.xlu0 %v685
        %v687 = vpop.xlane.xlu0 %686
        %v688 = vadd.f32 %v617, %v618
        %689 = vadd.xlane.f32.xlu0 %v688
        %v690 = vpop.xlane.xlu0 %689
        %v691 = vadd.f32 %v619, %v620
        %692 = vadd.xlane.f32.xlu0 %v691
        %v693 = vpop.xlane.xlu0 %692
        %v694 = vadd.f32 %v621, %v622
        %695 = vadd.xlane.f32.xlu0 %v694
        %v696 = vpop.xlane.xlu0 %695
        %v697 = vadd.f32 %v623, %v624
        %698 = vadd.xlane.f32.xlu0 %v697
        %v699 = vpop.xlane.xlu0 %698
        %v700 = vadd.f32 %v625, %v626
        %701 = vadd.xlane.f32.xlu0 %v700
        %v702 = vpop.xlane.xlu0 %701
        %v703 = vadd.f32 %v627, %v628
        %704 = vadd.xlane.f32.xlu0 %v703
        %v705 = vpop.xlane.xlu0 %704
        %v706 = vadd.f32 %v629, %v630
        %707 = vadd.xlane.f32.xlu0 %v706
        %v708 = vpop.xlane.xlu0 %707
        %v709 = vadd.f32 %v631, %v632
        %710 = vadd.xlane.f32.xlu0 %v709
        %v711 = vpop.xlane.xlu0 %710
        %v712 = vadd.f32 %v633, %v634
        %713 = vadd.xlane.f32.xlu0 %v712
        %v714 = vpop.xlane.xlu0 %713
        %v715 = vadd.f32 %v635, %v636
        %716 = vadd.xlane.f32.xlu0 %v715
        %v717 = vpop.xlane.xlu0 %716
        %v718 = vadd.f32 %v637, %v638
        %719 = vadd.xlane.f32.xlu0 %v718
        %v720 = vpop.xlane.xlu0 %719
        %v721 = vadd.f32 %v639, %v640
        %722 = vadd.xlane.f32.xlu0 %v721
        %v723 = vpop.xlane.xlu0 %722
        %v724 = vadd.f32 %v641, %v642
        %725 = vadd.xlane.f32.xlu0 %v724
        %v726 = vpop.xlane.xlu0 %725
        %v727 = vadd.f32 %v643, %v644
        %728 = vadd.xlane.f32.xlu0 %v727
        %v729 = vpop.xlane.xlu0 %728
        %v730 = vadd.f32 %v645, %v646
        %731 = vadd.xlane.f32.xlu0 %v730
        %v732 = vpop.xlane.xlu0 %731
        %v733 = vadd.f32 %v647, %v648
        %734 = vadd.xlane.f32.xlu0 %v733
        %v735 = vpop.xlane.xlu0 %734
        %v736 = vadd.f32 %v649, %v650
        %737 = vadd.xlane.f32.xlu0 %v736
        %v738 = vpop.xlane.xlu0 %737
        %v739 = vadd.f32 %v651, %v652
        %740 = vadd.xlane.f32.xlu0 %v739
        %v741 = vpop.xlane.xlu0 %740
        %v742 = vadd.f32 %v653, %v654
        %743 = vadd.xlane.f32.xlu0 %v742
        %v744 = vpop.xlane.xlu0 %743
        %v745 = vadd.f32 %v655, %v656
        %746 = vadd.xlane.f32.xlu0 %v745
        %v747 = vpop.xlane.xlu0 %746
        %v748 = vadd.f32 %v657, %v658
        %749 = vadd.xlane.f32.xlu0 %v748
        %v750 = vpop.xlane.xlu0 %749
        %v751 = vadd.f32 %v659, %v660
        %752 = vadd.xlane.f32.xlu0 %v751
        %v753 = vpop.xlane.xlu0 %752
        %v754 = vadd.f32 %v661, %v662
        %755 = vadd.xlane.f32.xlu0 %v754
        %v756 = vpop.xlane.xlu0 %755
        %v757 = vadd.f32 %v663, %v664
        %758 = vadd.xlane.f32.xlu0 %v757
        %v759 = vpop.xlane.xlu0 %758
        %v760 = vadd.f32 %v665, %v666
        %761 = vadd.xlane.f32.xlu0 %v760
        %v762 = vpop.xlane.xlu0 %761
        %v763 = vmul.f32 %v669, %v506
        %v764 = vmul.f32 %v672, %v506
        %v765 = vmul.f32 %v675, %v506
        %v766 = vmul.f32 %v678, %v506
        %v767 = vmul.f32 %v681, %v506
        %v768 = vmul.f32 %v684, %v506
        %v769 = vmul.f32 %v687, %v506
        %v770 = vmul.f32 %v690, %v506
        %v771 = vmul.f32 %v693, %v506
        %v772 = vmul.f32 %v696, %v506
        %v773 = vmul.f32 %v699, %v506
        %v774 = vmul.f32 %v702, %v506
        %v775 = vmul.f32 %v705, %v506
        %v776 = vmul.f32 %v708, %v506
        %v777 = vmul.f32 %v711, %v506
        %v778 = vmul.f32 %v714, %v506
        %v779 = vmul.f32 %v717, %v506
        %v780 = vmul.f32 %v720, %v506
        %v781 = vmul.f32 %v723, %v506
        %v782 = vmul.f32 %v726, %v506
        %v783 = vmul.f32 %v729, %v506
        %v784 = vmul.f32 %v732, %v506
        %v785 = vmul.f32 %v735, %v506
        %v786 = vmul.f32 %v738, %v506
        %v787 = vmul.f32 %v741, %v506
        %v788 = vmul.f32 %v744, %v506
        %v789 = vmul.f32 %v747, %v506
        %v790 = vmul.f32 %v750, %v506
        %v791 = vmul.f32 %v753, %v506
        %v792 = vmul.f32 %v756, %v506
        %v793 = vmul.f32 %v759, %v506
        %v794 = vmul.f32 %v762, %v506
        %v795 = vadd.f32 %v763, 1e-06
        %v796 = vadd.f32 %v764, 1e-06
        %v797 = vadd.f32 %v765, 1e-06
        %v798 = vadd.f32 %v766, 1e-06
        %v799 = vadd.f32 %v767, 1e-06
        %v800 = vadd.f32 %v768, 1e-06
        %v801 = vadd.f32 %v769, 1e-06
        %v802 = vadd.f32 %v770, 1e-06
        %v803 = vadd.f32 %v771, 1e-06
        %v804 = vadd.f32 %v772, 1e-06
        %v805 = vadd.f32 %v773, 1e-06
        %v806 = vadd.f32 %v774, 1e-06
        %v807 = vadd.f32 %v775, 1e-06
        %v808 = vadd.f32 %v776, 1e-06
        %v809 = vadd.f32 %v777, 1e-06
        %v810 = vadd.f32 %v778, 1e-06
        %v811 = vadd.f32 %v779, 1e-06
        %v812 = vadd.f32 %v780, 1e-06
        %v813 = vadd.f32 %v781, 1e-06
        %v814 = vadd.f32 %v782, 1e-06
        %v815 = vadd.f32 %v783, 1e-06
        %v816 = vadd.f32 %v784, 1e-06
        %v817 = vadd.f32 %v785, 1e-06
        %v818 = vadd.f32 %v786, 1e-06
        %v819 = vadd.f32 %v787, 1e-06
        %v820 = vadd.f32 %v788, 1e-06
        %v821 = vadd.f32 %v789, 1e-06
        %v822 = vadd.f32 %v790, 1e-06
        %v823 = vadd.f32 %v791, 1e-06
        %v824 = vadd.f32 %v792, 1e-06
        %v825 = vadd.f32 %v793, 1e-06
        %v826 = vadd.f32 %v794, 1e-06
        %v827 = vrsqrt.pop %v795
        %v828 = vrsqrt.pop %v796
        %v829 = vrsqrt.pop %v797
        %v830 = vrsqrt.pop %v798
        %v831 = vrsqrt.pop %v799
        %v832 = vrsqrt.pop %v800
        %v833 = vrsqrt.pop %v801
        %v834 = vrsqrt.pop %v802
        %v835 = vrsqrt.pop %v803
        %v836 = vrsqrt.pop %v804
        %v837 = vrsqrt.pop %v805
        %v838 = vrsqrt.pop %v806
        %v839 = vrsqrt.pop %v807
        %v840 = vrsqrt.pop %v808
        %v841 = vrsqrt.pop %v809
        %v842 = vrsqrt.pop %v810
        %v843 = vrsqrt.pop %v811
        %v844 = vrsqrt.pop %v812
        %v845 = vrsqrt.pop %v813
        %v846 = vrsqrt.pop %v814
        %v847 = vrsqrt.pop %v815
        %v848 = vrsqrt.pop %v816
        %v849 = vrsqrt.pop %v817
        %v850 = vrsqrt.pop %v818
        %v851 = vrsqrt.pop %v819
        %v852 = vrsqrt.pop %v820
        %v853 = vrsqrt.pop %v821
        %v854 = vrsqrt.pop %v822
        %v855 = vrsqrt.pop %v823
        %v856 = vrsqrt.pop %v824
        %v857 = vrsqrt.pop %v825
        %v858 = vrsqrt.pop %v826
        %v859 = vmul.f32 %v539, %v827
        %v860 = vmul.f32 %v540, %v827
        %v861 = vmul.f32 %v541, %v828
        %v862 = vmul.f32 %v542, %v828
        %v863 = vmul.f32 %v543, %v829
        %v864 = vmul.f32 %v544, %v829
        %v865 = vmul.f32 %v545, %v830
        %v866 = vmul.f32 %v546, %v830
        %v867 = vmul.f32 %v547, %v831
        %v868 = vmul.f32 %v548, %v831
        %v869 = vmul.f32 %v549, %v832
        %v870 = vmul.f32 %v550, %v832
        %v871 = vmul.f32 %v551, %v833
        %v872 = vmul.f32 %v552, %v833
        %v873 = vmul.f32 %v553, %v834
        %v874 = vmul.f32 %v554, %v834
        %v875 = vmul.f32 %v555, %v835
        %v876 = vmul.f32 %v556, %v835
        %v877 = vmul.f32 %v557, %v836
        %v878 = vmul.f32 %v558, %v836
        %v879 = vmul.f32 %v559, %v837
        %v880 = vmul.f32 %v560, %v837
        %v881 = vmul.f32 %v561, %v838
        %v882 = vmul.f32 %v562, %v838
        %v883 = vmul.f32 %v563, %v839
        %v884 = vmul.f32 %v564, %v839
        %v885 = vmul.f32 %v565, %v840
        %v886 = vmul.f32 %v566, %v840
        %v887 = vmul.f32 %v567, %v841
        %v888 = vmul.f32 %v568, %v841
        %v889 = vmul.f32 %v569, %v842
        %v890 = vmul.f32 %v570, %v842
        %v891 = vmul.f32 %v571, %v843
        %v892 = vmul.f32 %v572, %v843
        %v893 = vmul.f32 %v573, %v844
        %v894 = vmul.f32 %v574, %v844
        %v895 = vmul.f32 %v575, %v845
        %v896 = vmul.f32 %v576, %v845
        %v897 = vmul.f32 %v577, %v846
        %v898 = vmul.f32 %v578, %v846
        %v899 = vmul.f32 %v579, %v847
        %v900 = vmul.f32 %v580, %v847
        %v901 = vmul.f32 %v581, %v848
        %v902 = vmul.f32 %v582, %v848
        %v903 = vmul.f32 %v583, %v849
        %v904 = vmul.f32 %v584, %v849
        %v905 = vmul.f32 %v585, %v850
        %v906 = vmul.f32 %v586, %v850
        %v907 = vmul.f32 %v587, %v851
        %v908 = vmul.f32 %v588, %v851
        %v909 = vmul.f32 %v589, %v852
        %v910 = vmul.f32 %v590, %v852
        %v911 = vmul.f32 %v591, %v853
        %v912 = vmul.f32 %v592, %v853
        %v913 = vmul.f32 %v593, %v854
        %v914 = vmul.f32 %v594, %v854
        %v915 = vmul.f32 %v595, %v855
        %v916 = vmul.f32 %v596, %v855
        %v917 = vmul.f32 %v597, %v856
        %v918 = vmul.f32 %v598, %v856
        %v919 = vmul.f32 %v599, %v857
        %v920 = vmul.f32 %v600, %v857
        %v921 = vmul.f32 %v601, %v858
        %v922 = vmul.f32 %v602, %v858
        %v923 = vld [vmem:[#allocation5] sm:$0x3]
        %v925 = vlaneseq
        %v926 = vshrl.u32 %v925, 7
        %v927 = vsub.s32 0, %v926
        %v928 = vrot.slane %v923, %v927
        %v929 = vlaneseq
        %v930 = vshrl.u32 %v929, 7
        %v931 = vsub.s32 1, %v930
        %v932 = vrot.slane %v923, %v931
        %v935 = vmul.f32 %v859, %v928
        %v936 = vmul.f32 %v860, %v932
        %v937 = vmul.f32 %v861, %v928
        %v938 = vmul.f32 %v862, %v932
        %v939 = vmul.f32 %v863, %v928
        %v940 = vmul.f32 %v864, %v932
        %v941 = vmul.f32 %v865, %v928
        %v942 = vmul.f32 %v866, %v932
        %v943 = vmul.f32 %v867, %v928
        %v944 = vmul.f32 %v868, %v932
        %v945 = vmul.f32 %v869, %v928
        %v946 = vmul.f32 %v870, %v932
        %v947 = vmul.f32 %v871, %v928
        %v948 = vmul.f32 %v872, %v932
        %v949 = vmul.f32 %v873, %v928
        %v950 = vmul.f32 %v874, %v932
        %v951 = vmul.f32 %v875, %v928
        %v952 = vmul.f32 %v876, %v932
        %v953 = vmul.f32 %v877, %v928
        %v954 = vmul.f32 %v878, %v932
        %v955 = vmul.f32 %v879, %v928
        %v956 = vmul.f32 %v880, %v932
        %v957 = vmul.f32 %v881, %v928
        %v958 = vmul.f32 %v882, %v932
        %v959 = vmul.f32 %v883, %v928
        %v960 = vmul.f32 %v884, %v932
        %v961 = vmul.f32 %v885, %v928
        %v962 = vmul.f32 %v886, %v932
        %v963 = vmul.f32 %v887, %v928
        %v964 = vmul.f32 %v888, %v932
        %v965 = vmul.f32 %v889, %v928
        %v966 = vmul.f32 %v890, %v932
        %v967 = vmul.f32 %v891, %v928
        %v968 = vmul.f32 %v892, %v932
        %v969 = vmul.f32 %v893, %v928
        %v970 = vmul.f32 %v894, %v932
        %v971 = vmul.f32 %v895, %v928
        %v972 = vmul.f32 %v896, %v932
        %v973 = vmul.f32 %v897, %v928
        %v974 = vmul.f32 %v898, %v932
        %v975 = vmul.f32 %v899, %v928
        %v976 = vmul.f32 %v900, %v932
        %v977 = vmul.f32 %v901, %v928
        %v978 = vmul.f32 %v902, %v932
        %v979 = vmul.f32 %v903, %v928
        %v980 = vmul.f32 %v904, %v932
        %v981 = vmul.f32 %v905, %v928
        %v982 = vmul.f32 %v906, %v932
        %v983 = vmul.f32 %v907, %v928
        %v984 = vmul.f32 %v908, %v932
        %v985 = vmul.f32 %v909, %v928
        %v986 = vmul.f32 %v910, %v932
        %v987 = vmul.f32 %v911, %v928
        %v988 = vmul.f32 %v912, %v932
        %v989 = vmul.f32 %v913, %v928
        %v990 = vmul.f32 %v914, %v932
        %v991 = vmul.f32 %v915, %v928
        %v992 = vmul.f32 %v916, %v932
        %v993 = vmul.f32 %v917, %v928
        %v994 = vmul.f32 %v918, %v932
        %v995 = vmul.f32 %v919, %v928
        %v996 = vmul.f32 %v920, %v932
        %v997 = vmul.f32 %v921, %v928
        %v998 = vmul.f32 %v922, %v932
        %v999 = vld [vmem:[#allocation7] sm:$0x3]
        %v1001 = vlaneseq
        %v1002 = vshrl.u32 %v1001, 7
        %v1003 = vsub.s32 0, %v1002
        %v1004 = vrot.slane %v999, %v1003
        %v1005 = vlaneseq
        %v1006 = vshrl.u32 %v1005, 7
        %v1007 = vsub.s32 1, %v1006
        %v1008 = vrot.slane %v999, %v1007
        %v1011 = vadd.f32 %v935, %v1004
        %v1012 = vadd.f32 %v936, %v1008
        %v1013 = vadd.f32 %v937, %v1004
        %v1014 = vadd.f32 %v938, %v1008
        %v1015 = vadd.f32 %v939, %v1004
        %v1016 = vadd.f32 %v940, %v1008
        %v1017 = vadd.f32 %v941, %v1004
        %v1018 = vadd.f32 %v942, %v1008
        %v1019 = vadd.f32 %v943, %v1004
        %v1020 = vadd.f32 %v944, %v1008
        %v1021 = vadd.f32 %v945, %v1004
        %v1022 = vadd.f32 %v946, %v1008
        %v1023 = vadd.f32 %v947, %v1004
        %v1024 = vadd.f32 %v948, %v1008
        %v1025 = vadd.f32 %v949, %v1004
        %v1026 = vadd.f32 %v950, %v1008
        %v1027 = vadd.f32 %v951, %v1004
        %v1028 = vadd.f32 %v952, %v1008
        %v1029 = vadd.f32 %v953, %v1004
        %v1030 = vadd.f32 %v954, %v1008
        %v1031 = vadd.f32 %v955, %v1004
        %v1032 = vadd.f32 %v956, %v1008
        %v1033 = vadd.f32 %v957, %v1004
        %v1034 = vadd.f32 %v958, %v1008
        %v1035 = vadd.f32 %v959, %v1004
        %v1036 = vadd.f32 %v960, %v1008
        %v1037 = vadd.f32 %v961, %v1004
        %v1038 = vadd.f32 %v962, %v1008
        %v1039 = vadd.f32 %v963, %v1004
        %v1040 = vadd.f32 %v964, %v1008
        %v1041 = vadd.f32 %v965, %v1004
        %v1042 = vadd.f32 %v966, %v1008
        %v1043 = vadd.f32 %v967, %v1004
        %v1044 = vadd.f32 %v968, %v1008
        %v1045 = vadd.f32 %v969, %v1004
        %v1046 = vadd.f32 %v970, %v1008
        %v1047 = vadd.f32 %v971, %v1004
        %v1048 = vadd.f32 %v972, %v1008
        %v1049 = vadd.f32 %v973, %v1004
        %v1050 = vadd.f32 %v974, %v1008
        %v1051 = vadd.f32 %v975, %v1004
        %v1052 = vadd.f32 %v976, %v1008
        %v1053 = vadd.f32 %v977, %v1004
        %v1054 = vadd.f32 %v978, %v1008
        %v1055 = vadd.f32 %v979, %v1004
        %v1056 = vadd.f32 %v980, %v1008
        %v1057 = vadd.f32 %v981, %v1004
        %v1058 = vadd.f32 %v982, %v1008
        %v1059 = vadd.f32 %v983, %v1004
        %v1060 = vadd.f32 %v984, %v1008
        %v1061 = vadd.f32 %v985, %v1004
        %v1062 = vadd.f32 %v986, %v1008
        %v1063 = vadd.f32 %v987, %v1004
        %v1064 = vadd.f32 %v988, %v1008
        %v1065 = vadd.f32 %v989, %v1004
        %v1066 = vadd.f32 %v990, %v1008
        %v1067 = vadd.f32 %v991, %v1004
        %v1068 = vadd.f32 %v992, %v1008
        %v1069 = vadd.f32 %v993, %v1004
        %v1070 = vadd.f32 %v994, %v1008
        %v1071 = vadd.f32 %v995, %v1004
        %v1072 = vadd.f32 %v996, %v1008
        %v1073 = vadd.f32 %v997, %v1004
        %v1074 = vadd.f32 %v998, %v1008
        %v1075 = vpack.c.bf16 %v1013, %v1011
        %v1076 = vpack.c.bf16 %v1014, %v1012
        %v1077 = vpack.c.bf16 %v1017, %v1015
        %v1078 = vpack.c.bf16 %v1018, %v1016
        %v1079 = vpack.c.bf16 %v1021, %v1019
        %v1080 = vpack.c.bf16 %v1022, %v1020
        %v1081 = vpack.c.bf16 %v1025, %v1023
        %v1082 = vpack.c.bf16 %v1026, %v1024
        %v1083 = vpack.c.bf16 %v1029, %v1027
        %v1084 = vpack.c.bf16 %v1030, %v1028
        %v1085 = vpack.c.bf16 %v1033, %v1031
        %v1086 = vpack.c.bf16 %v1034, %v1032
        %v1087 = vpack.c.bf16 %v1037, %v1035
        %v1088 = vpack.c.bf16 %v1038, %v1036
        %v1089 = vpack.c.bf16 %v1041, %v1039
        %v1090 = vpack.c.bf16 %v1042, %v1040
        %v1091 = vpack.c.bf16 %v1045, %v1043
        %v1092 = vpack.c.bf16 %v1046, %v1044
        %v1093 = vpack.c.bf16 %v1049, %v1047
        %v1094 = vpack.c.bf16 %v1050, %v1048
        %v1095 = vpack.c.bf16 %v1053, %v1051
        %v1096 = vpack.c.bf16 %v1054, %v1052
        %v1097 = vpack.c.bf16 %v1057, %v1055
        %v1098 = vpack.c.bf16 %v1058, %v1056
        %v1099 = vpack.c.bf16 %v1061, %v1059
        %v1100 = vpack.c.bf16 %v1062, %v1060
        %v1101 = vpack.c.bf16 %v1065, %v1063
        %v1102 = vpack.c.bf16 %v1066, %v1064
        %v1103 = vpack.c.bf16 %v1069, %v1067
        %v1104 = vpack.c.bf16 %v1070, %v1068
        %v1105 = vpack.c.bf16 %v1073, %v1071
        %v1106 = vpack.c.bf16 %v1074, %v1072
        %v1107 = vld [vmem:[%s301] sm:$0xff]
        %v1108 = vld [vmem:[%s301 + $0x8] sm:$0xff]
        %v1109 = vld [vmem:[%s301 + $0x10] sm:$0xff]
        %v1110 = vld [vmem:[%s301 + $0x18] sm:$0xff]
        %v1111 = vld [vmem:[%s301 + $0x20] sm:$0xff]
        %v1112 = vld [vmem:[%s301 + $0x28] sm:$0xff]
        %v1113 = vld [vmem:[%s301 + $0x30] sm:$0xff]
        %v1114 = vld [vmem:[%s301 + $0x38] sm:$0xff]
        %v1115 = vld [vmem:[%s301 + $0x40] sm:$0xff]
        %v1116 = vld [vmem:[%s301 + $0x48] sm:$0xff]
        %v1117 = vld [vmem:[%s301 + $0x50] sm:$0xff]
        %v1118 = vld [vmem:[%s301 + $0x58] sm:$0xff]
        %v1119 = vld [vmem:[%s301 + $0x60] sm:$0xff]
        %v1120 = vld [vmem:[%s301 + $0x68] sm:$0xff]
        %v1121 = vld [vmem:[%s301 + $0x70] sm:$0xff]
        %v1122 = vld [vmem:[%s301 + $0x78] sm:$0xff]
        %v1123 = vld [vmem:[%s301 + $0x80] sm:$0xff]
        %v1124 = vld [vmem:[%s301 + $0x88] sm:$0xff]
        %v1125 = vld [vmem:[%s301 + $0x90] sm:$0xff]
        %v1126 = vld [vmem:[%s301 + $0x98] sm:$0xff]
        %v1127 = vld [vmem:[%s301 + $0xa0] sm:$0xff]
        %v1128 = vld [vmem:[%s301 + $0xa8] sm:$0xff]
        %v1129 = vld [vmem:[%s301 + $0xb0] sm:$0xff]
        %v1130 = vld [vmem:[%s301 + $0xb8] sm:$0xff]
        %v1131 = vld [vmem:[%s301 + $0xc0] sm:$0xff]
        %v1132 = vld [vmem:[%s301 + $0xc8] sm:$0xff]
        %v1133 = vld [vmem:[%s301 + $0xd0] sm:$0xff]
        %v1134 = vld [vmem:[%s301 + $0xd8] sm:$0xff]
        %v1135 = vld [vmem:[%s301 + $0xe0] sm:$0xff]
        %v1136 = vld [vmem:[%s301 + $0xe8] sm:$0xff]
        %v1137 = vld [vmem:[%s301 + $0xf0] sm:$0xff]
        %v1138 = vld [vmem:[%s301 + $0xf8] sm:$0xff]
        %v1139 = vld [vmem:[%s342] sm:$0x3]
        %v1141 = vlaneseq
        %v1142 = vshrl.u32 %v1141, 7
        %v1143 = vsub.s32 0, %v1142
        %v1144 = vrot.slane %v1139, %v1143
        %v1145 = vlaneseq
        %v1146 = vshrl.u32 %v1145, 7
        %v1147 = vsub.s32 1, %v1146
        %v1148 = vrot.slane %v1139, %v1147
        %v1183 = vunpack.c.l.b16 %v1107
        %v1184 = vunpack.c.h.b16 %v1107
        %v1185 = vunpack.c.l.b16 %v1108
        %v1186 = vunpack.c.h.b16 %v1108
        %v1187 = vunpack.c.l.b16 %v1109
        %v1188 = vunpack.c.h.b16 %v1109
        %v1189 = vunpack.c.l.b16 %v1110
        %v1190 = vunpack.c.h.b16 %v1110
        %v1191 = vunpack.c.l.b16 %v1111
        %v1192 = vunpack.c.h.b16 %v1111
        %v1193 = vunpack.c.l.b16 %v1112
        %v1194 = vunpack.c.h.b16 %v1112
        %v1195 = vunpack.c.l.b16 %v1113
        %v1196 = vunpack.c.h.b16 %v1113
        %v1197 = vunpack.c.l.b16 %v1114
        %v1198 = vunpack.c.h.b16 %v1114
        %v1199 = vunpack.c.l.b16 %v1115
        %v1200 = vunpack.c.h.b16 %v1115
        %v1201 = vunpack.c.l.b16 %v1116
        %v1202 = vunpack.c.h.b16 %v1116
        %v1203 = vunpack.c.l.b16 %v1117
        %v1204 = vunpack.c.h.b16 %v1117
        %v1205 = vunpack.c.l.b16 %v1118
        %v1206 = vunpack.c.h.b16 %v1118
        %v1207 = vunpack.c.l.b16 %v1119
        %v1208 = vunpack.c.h.b16 %v1119
        %v1209 = vunpack.c.l.b16 %v1120
        %v1210 = vunpack.c.h.b16 %v1120
        %v1211 = vunpack.c.l.b16 %v1121
        %v1212 = vunpack.c.h.b16 %v1121
        %v1213 = vunpack.c.l.b16 %v1122
        %v1214 = vunpack.c.h.b16 %v1122
        %v1215 = vunpack.c.l.b16 %v1123
        %v1216 = vunpack.c.h.b16 %v1123
        %v1217 = vunpack.c.l.b16 %v1124
        %v1218 = vunpack.c.h.b16 %v1124
        %v1219 = vunpack.c.l.b16 %v1125
        %v1220 = vunpack.c.h.b16 %v1125
        %v1221 = vunpack.c.l.b16 %v1126
        %v1222 = vunpack.c.h.b16 %v1126
        %v1223 = vunpack.c.l.b16 %v1127
        %v1224 = vunpack.c.h.b16 %v1127
        %v1225 = vunpack.c.l.b16 %v1128
        %v1226 = vunpack.c.h.b16 %v1128
        %v1227 = vunpack.c.l.b16 %v1129
        %v1228 = vunpack.c.h.b16 %v1129
        %v1229 = vunpack.c.l.b16 %v1130
        %v1230 = vunpack.c.h.b16 %v1130
        %v1231 = vunpack.c.l.b16 %v1131
        %v1232 = vunpack.c.h.b16 %v1131
        %v1233 = vunpack.c.l.b16 %v1132
        %v1234 = vunpack.c.h.b16 %v1132
        %v1235 = vunpack.c.l.b16 %v1133
        %v1236 = vunpack.c.h.b16 %v1133
        %v1237 = vunpack.c.l.b16 %v1134
        %v1238 = vunpack.c.h.b16 %v1134
        %v1239 = vunpack.c.l.b16 %v1135
        %v1240 = vunpack.c.h.b16 %v1135
        %v1241 = vunpack.c.l.b16 %v1136
        %v1242 = vunpack.c.h.b16 %v1136
        %v1243 = vunpack.c.l.b16 %v1137
        %v1244 = vunpack.c.h.b16 %v1137
        %v1245 = vunpack.c.l.b16 %v1138
        %v1246 = vunpack.c.h.b16 %v1138
        %v1247 = vpack.c.b16 %v1185, %v1183
        %v1248 = vpack.c.b16 %v1186, %v1184
        %v1249 = vpack.c.b16 %v1189, %v1187
        %v1250 = vpack.c.b16 %v1190, %v1188
        %v1251 = vpack.c.b16 %v1193, %v1191
        %v1252 = vpack.c.b16 %v1194, %v1192
        %v1253 = vpack.c.b16 %v1197, %v1195
        %v1254 = vpack.c.b16 %v1198, %v1196
        %v1255 = vpack.c.b16 %v1201, %v1199
        %v1256 = vpack.c.b16 %v1202, %v1200
        %v1257 = vpack.c.b16 %v1205, %v1203
        %v1258 = vpack.c.b16 %v1206, %v1204
        %v1259 = vpack.c.b16 %v1209, %v1207
        %v1260 = vpack.c.b16 %v1210, %v1208
        %v1261 = vpack.c.b16 %v1213, %v1211
        %v1262 = vpack.c.b16 %v1214, %v1212
        %v1263 = vpack.c.b16 %v1217, %v1215
        %v1264 = vpack.c.b16 %v1218, %v1216
        %v1265 = vpack.c.b16 %v1221, %v1219
        %v1266 = vpack.c.b16 %v1222, %v1220
        %v1267 = vpack.c.b16 %v1225, %v1223
        %v1268 = vpack.c.b16 %v1226, %v1224
        %v1269 = vpack.c.b16 %v1229, %v1227
        %v1270 = vpack.c.b16 %v1230, %v1228
        %v1271 = vpack.c.b16 %v1233, %v1231
        %v1272 = vpack.c.b16 %v1234, %v1232
        %v1273 = vpack.c.b16 %v1237, %v1235
        %v1274 = vpack.c.b16 %v1238, %v1236
        %v1275 = vpack.c.b16 %v1241, %v1239
        %v1276 = vpack.c.b16 %v1242, %v1240
        %v1277 = vpack.c.b16 %v1245, %v1243
        %v1278 = vpack.c.b16 %v1246, %v1244
        %1311 = vmatprep.subr.bf16.mxu0 %v1262
        %1312 = vmatpush1.bf16.msra.mxu0 %v1261
        %1313 = vmatprep.subr.bf16.mxu0 %v1260
        %1314 = vmatpush1.bf16.msra.mxu0 %v1259
        %1315 = vmatprep.subr.bf16.mxu0 %v1258
        %1316 = vmatpush1.bf16.msra.mxu0 %v1257
        %1317 = vmatprep.subr.bf16.mxu0 %v1256
        %1318 = vmatpush1.bf16.msra.mxu0 %v1255
        %1319 = vmatprep.subr.bf16.mxu0 %v1254
        %1320 = vmatpush1.bf16.msra.mxu0 %v1253
        %1321 = vmatprep.subr.bf16.mxu0 %v1252
        %1322 = vmatpush1.bf16.msra.mxu0 %v1251
        %1323 = vmatprep.subr.bf16.mxu0 %v1250
        %1324 = vmatpush1.bf16.msra.mxu0 %v1249
        %1325 = vmatprep.subr.bf16.mxu0 %v1248
        %1326 = vmatpush1.bf16.msra.mxu0 %v1247
        %1327 = vmatprep.subr.bf16.mxu0 %v1278
        %1328 = vmatpush2.bf16.msra.mxu0 %v1277
        %1329 = vmatprep.subr.bf16.mxu0 %v1276
        %1330 = vmatpush2.bf16.msra.mxu0 %v1275
        %1331 = vmatprep.subr.bf16.mxu0 %v1274
        %1332 = vmatpush2.bf16.msra.mxu0 %v1273
        %1333 = vmatprep.subr.bf16.mxu0 %v1272
        %1334 = vmatpush2.bf16.msra.mxu0 %v1271
        %1335 = vmatprep.subr.bf16.mxu0 %v1270
        %1336 = vmatpush2.bf16.msra.mxu0 %v1269
        %1337 = vmatprep.subr.bf16.mxu0 %v1268
        %1338 = vmatpush2.bf16.msra.mxu0 %v1267
        %1339 = vmatprep.subr.bf16.mxu0 %v1266
        %1340 = vmatpush2.bf16.msra.mxu0 %v1265
        %1341 = vmatprep.subr.bf16.mxu0 %v1264
        %1342 = vmatpush2.bf16.msra.mxu0 %v1263
        %1343 = vmatprep.mubr.bf16.mxu0 %v1076
        %1344 = vmatmul.mubr.bf16.gmra.mxu0 %v1075
        %v1345 = vpop.f32.mrf.mxu0
        %v1346 = vadd.f32 %v1144, %v1345
        %v1347 = vpop.f32.mrf.mxu0
        %v1348 = vadd.f32 %v1148, %v1347
        %v1349 = vpop.f32.mrf.mxu0
        %v1350 = vadd.f32 %v1144, %v1349
        %v1351 = vpop.f32.mrf.mxu0
        %v1352 = vadd.f32 %v1148, %v1351
        %1353 = vmatprep.mubr.bf16.mxu0 %v1078
        %1354 = vmatmul.mubr.bf16.gmra.mxu0 %v1077
        %v1355 = vpop.f32.mrf.mxu0
        %v1356 = vadd.f32 %v1144, %v1355
        %v1357 = vpop.f32.mrf.mxu0
        %v1358 = vadd.f32 %v1148, %v1357
        %v1359 = vpop.f32.mrf.mxu0
        %v1360 = vadd.f32 %v1144, %v1359
        %v1361 = vpop.f32.mrf.mxu0
        %v1362 = vadd.f32 %v1148, %v1361
        %1363 = vmatprep.mubr.bf16.mxu0 %v1080
        %1364 = vmatmul.mubr.bf16.gmra.mxu0 %v1079
        %v1365 = vpop.f32.mrf.mxu0
        %v1366 = vadd.f32 %v1144, %v1365
        %v1367 = vpop.f32.mrf.mxu0
        %v1368 = vadd.f32 %v1148, %v1367
        %v1369 = vpop.f32.mrf.mxu0
        %v1370 = vadd.f32 %v1144, %v1369
        %v1371 = vpop.f32.mrf.mxu0
        %v1372 = vadd.f32 %v1148, %v1371
        %1373 = vmatprep.mubr.bf16.mxu0 %v1082
        %1374 = vmatmul.mubr.bf16.gmra.mxu0 %v1081
        %v1375 = vpop.f32.mrf.mxu0
        %v1376 = vadd.f32 %v1144, %v1375
        %v1377 = vpop.f32.mrf.mxu0
        %v1378 = vadd.f32 %v1148, %v1377
        %v1379 = vpop.f32.mrf.mxu0
        %v1380 = vadd.f32 %v1144, %v1379
        %v1381 = vpop.f32.mrf.mxu0
        %v1382 = vadd.f32 %v1148, %v1381
        %1383 = vmatprep.mubr.bf16.mxu0 %v1084
        %1384 = vmatmul.mubr.bf16.gmra.mxu0 %v1083
        %v1385 = vpop.f32.mrf.mxu0
        %v1386 = vadd.f32 %v1144, %v1385
        %v1387 = vpop.f32.mrf.mxu0
        %v1388 = vadd.f32 %v1148, %v1387
        %v1389 = vpop.f32.mrf.mxu0
        %v1390 = vadd.f32 %v1144, %v1389
        %v1391 = vpop.f32.mrf.mxu0
        %v1392 = vadd.f32 %v1148, %v1391
        %1393 = vmatprep.mubr.bf16.mxu0 %v1086
        %1394 = vmatmul.mubr.bf16.gmra.mxu0 %v1085
        %v1395 = vpop.f32.mrf.mxu0
        %v1396 = vadd.f32 %v1144, %v1395
        %v1397 = vpop.f32.mrf.mxu0
        %v1398 = vadd.f32 %v1148, %v1397
        %v1399 = vpop.f32.mrf.mxu0
        %v1400 = vadd.f32 %v1144, %v1399
        %v1401 = vpop.f32.mrf.mxu0
        %v1402 = vadd.f32 %v1148, %v1401
        %1403 = vmatprep.mubr.bf16.mxu0 %v1088
        %1404 = vmatmul.mubr.bf16.gmra.mxu0 %v1087
        %v1405 = vpop.f32.mrf.mxu0
        %v1406 = vadd.f32 %v1144, %v1405
        %v1407 = vpop.f32.mrf.mxu0
        %v1408 = vadd.f32 %v1148, %v1407
        %v1409 = vpop.f32.mrf.mxu0
        %v1410 = vadd.f32 %v1144, %v1409
        %v1411 = vpop.f32.mrf.mxu0
        %v1412 = vadd.f32 %v1148, %v1411
        %1413 = vmatprep.mubr.bf16.mxu0 %v1090
        %1414 = vmatmul.mubr.bf16.gmra.mxu0 %v1089
        %v1415 = vpop.f32.mrf.mxu0
        %v1416 = vadd.f32 %v1144, %v1415
        %v1417 = vpop.f32.mrf.mxu0
        %v1418 = vadd.f32 %v1148, %v1417
        %v1419 = vpop.f32.mrf.mxu0
        %v1420 = vadd.f32 %v1144, %v1419
        %v1421 = vpop.f32.mrf.mxu0
        %v1422 = vadd.f32 %v1148, %v1421
        %1423 = vmatprep.mubr.bf16.mxu0 %v1092
        %1424 = vmatmul.mubr.bf16.gmra.mxu0 %v1091
        %v1425 = vpop.f32.mrf.mxu0
        %v1426 = vadd.f32 %v1144, %v1425
        %v1427 = vpop.f32.mrf.mxu0
        %v1428 = vadd.f32 %v1148, %v1427
        %v1429 = vpop.f32.mrf.mxu0
        %v1430 = vadd.f32 %v1144, %v1429
        %v1431 = vpop.f32.mrf.mxu0
        %v1432 = vadd.f32 %v1148, %v1431
        %1433 = vmatprep.mubr.bf16.mxu0 %v1094
        %1434 = vmatmul.mubr.bf16.gmra.mxu0 %v1093
        %v1435 = vpop.f32.mrf.mxu0
        %v1436 = vadd.f32 %v1144, %v1435
        %v1437 = vpop.f32.mrf.mxu0
        %v1438 = vadd.f32 %v1148, %v1437
        %v1439 = vpop.f32.mrf.mxu0
        %v1440 = vadd.f32 %v1144, %v1439
        %v1441 = vpop.f32.mrf.mxu0
        %v1442 = vadd.f32 %v1148, %v1441
        %1443 = vmatprep.mubr.bf16.mxu0 %v1096
        %1444 = vmatmul.mubr.bf16.gmra.mxu0 %v1095
        %v1445 = vpop.f32.mrf.mxu0
        %v1446 = vadd.f32 %v1144, %v1445
        %v1447 = vpop.f32.mrf.mxu0
        %v1448 = vadd.f32 %v1148, %v1447
        %v1449 = vpop.f32.mrf.mxu0
        %v1450 = vadd.f32 %v1144, %v1449
        %v1451 = vpop.f32.mrf.mxu0
        %v1452 = vadd.f32 %v1148, %v1451
        %1453 = vmatprep.mubr.bf16.mxu0 %v1098
        %1454 = vmatmul.mubr.bf16.gmra.mxu0 %v1097
        %v1455 = vpop.f32.mrf.mxu0
        %v1456 = vadd.f32 %v1144, %v1455
        %v1457 = vpop.f32.mrf.mxu0
        %v1458 = vadd.f32 %v1148, %v1457
        %v1459 = vpop.f32.mrf.mxu0
        %v1460 = vadd.f32 %v1144, %v1459
        %v1461 = vpop.f32.mrf.mxu0
        %v1462 = vadd.f32 %v1148, %v1461
        %1463 = vmatprep.mubr.bf16.mxu0 %v1100
        %1464 = vmatmul.mubr.bf16.gmra.mxu0 %v1099
        %v1465 = vpop.f32.mrf.mxu0
        %v1466 = vadd.f32 %v1144, %v1465
        %v1467 = vpop.f32.mrf.mxu0
        %v1468 = vadd.f32 %v1148, %v1467
        %v1469 = vpop.f32.mrf.mxu0
        %v1470 = vadd.f32 %v1144, %v1469
        %v1471 = vpop.f32.mrf.mxu0
        %v1472 = vadd.f32 %v1148, %v1471
        %1473 = vmatprep.mubr.bf16.mxu0 %v1102
        %1474 = vmatmul.mubr.bf16.gmra.mxu0 %v1101
        %v1475 = vpop.f32.mrf.mxu0
        %v1476 = vadd.f32 %v1144, %v1475
        %v1477 = vpop.f32.mrf.mxu0
        %v1478 = vadd.f32 %v1148, %v1477
        %v1479 = vpop.f32.mrf.mxu0
        %v1480 = vadd.f32 %v1144, %v1479
        %v1481 = vpop.f32.mrf.mxu0
        %v1482 = vadd.f32 %v1148, %v1481
        %1483 = vmatprep.mubr.bf16.mxu0 %v1104
        %1484 = vmatmul.mubr.bf16.gmra.mxu0 %v1103
        %v1485 = vpop.f32.mrf.mxu0
        %v1486 = vadd.f32 %v1144, %v1485
        %v1487 = vpop.f32.mrf.mxu0
        %v1488 = vadd.f32 %v1148, %v1487
        %v1489 = vpop.f32.mrf.mxu0
        %v1490 = vadd.f32 %v1144, %v1489
        %v1491 = vpop.f32.mrf.mxu0
        %v1492 = vadd.f32 %v1148, %v1491
        %1493 = vmatprep.mubr.bf16.mxu0 %v1106
        %1494 = vmatmul.mubr.bf16.gmra.mxu0 %v1105
        %v1495 = vpop.f32.mrf.mxu0
        %v1496 = vadd.f32 %v1144, %v1495
        %v1497 = vpop.f32.mrf.mxu0
        %v1498 = vadd.f32 %v1148, %v1497
        %v1499 = vpop.f32.mrf.mxu0
        %v1500 = vadd.f32 %v1144, %v1499
        %v1501 = vpop.f32.mrf.mxu0
        %v1502 = vadd.f32 %v1148, %v1501
        %1503 = vdwg.mxu0
        %v1504 = vpack.c.bf16 %v1350, %v1346
        %v1505 = vpack.c.bf16 %v1352, %v1348
        %v1506 = vpack.c.bf16 %v1360, %v1356
        %v1507 = vpack.c.bf16 %v1362, %v1358
        %v1508 = vpack.c.bf16 %v1370, %v1366
        %v1509 = vpack.c.bf16 %v1372, %v1368
        %v1510 = vpack.c.bf16 %v1380, %v1376
        %v1511 = vpack.c.bf16 %v1382, %v1378
        %v1512 = vpack.c.bf16 %v1390, %v1386
        %v1513 = vpack.c.bf16 %v1392, %v1388
        %v1514 = vpack.c.bf16 %v1400, %v1396
        %v1515 = vpack.c.bf16 %v1402, %v1398
        %v1516 = vpack.c.bf16 %v1410, %v1406
        %v1517 = vpack.c.bf16 %v1412, %v1408
        %v1518 = vpack.c.bf16 %v1420, %v1416
        %v1519 = vpack.c.bf16 %v1422, %v1418
        %v1520 = vpack.c.bf16 %v1430, %v1426
        %v1521 = vpack.c.bf16 %v1432, %v1428
        %v1522 = vpack.c.bf16 %v1440, %v1436
        %v1523 = vpack.c.bf16 %v1442, %v1438
        %v1524 = vpack.c.bf16 %v1450, %v1446
        %v1525 = vpack.c.bf16 %v1452, %v1448
        %v1526 = vpack.c.bf16 %v1460, %v1456
        %v1527 = vpack.c.bf16 %v1462, %v1458
        %v1528 = vpack.c.bf16 %v1470, %v1466
        %v1529 = vpack.c.bf16 %v1472, %v1468
        %v1530 = vpack.c.bf16 %v1480, %v1476
        %v1531 = vpack.c.bf16 %v1482, %v1478
        %v1532 = vpack.c.bf16 %v1490, %v1486
        %v1533 = vpack.c.bf16 %v1492, %v1488
        %v1534 = vpack.c.bf16 %v1500, %v1496
        %v1535 = vpack.c.bf16 %v1502, %v1498
        %v1568 = vunpack.c.l.b16 %v1504
        %v1569 = vunpack.c.l.b16 %v1505
        %v1570 = vunpack.c.h.b16 %v1504
        %v1571 = vunpack.c.h.b16 %v1505
        %v1572 = vunpack.c.l.b16 %v1506
        %v1573 = vunpack.c.l.b16 %v1507
        %v1574 = vunpack.c.h.b16 %v1506
        %v1575 = vunpack.c.h.b16 %v1507
        %v1576 = vunpack.c.l.b16 %v1508
        %v1577 = vunpack.c.l.b16 %v1509
        %v1578 = vunpack.c.h.b16 %v1508
        %v1579 = vunpack.c.h.b16 %v1509
        %v1580 = vunpack.c.l.b16 %v1510
        %v1581 = vunpack.c.l.b16 %v1511
        %v1582 = vunpack.c.h.b16 %v1510
        %v1583 = vunpack.c.h.b16 %v1511
        %v1584 = vunpack.c.l.b16 %v1512
        %v1585 = vunpack.c.l.b16 %v1513
        %v1586 = vunpack.c.h.b16 %v1512
        %v1587 = vunpack.c.h.b16 %v1513
        %v1588 = vunpack.c.l.b16 %v1514
        %v1589 = vunpack.c.l.b16 %v1515
        %v1590 = vunpack.c.h.b16 %v1514
        %v1591 = vunpack.c.h.b16 %v1515
        %v1592 = vunpack.c.l.b16 %v1516
        %v1593 = vunpack.c.l.b16 %v1517
        %v1594 = vunpack.c.h.b16 %v1516
        %v1595 = vunpack.c.h.b16 %v1517
        %v1596 = vunpack.c.l.b16 %v1518
        %v1597 = vunpack.c.l.b16 %v1519
        %v1598 = vunpack.c.h.b16 %v1518
        %v1599 = vunpack.c.h.b16 %v1519
        %v1600 = vunpack.c.l.b16 %v1520
        %v1601 = vunpack.c.l.b16 %v1521
        %v1602 = vunpack.c.h.b16 %v1520
        %v1603 = vunpack.c.h.b16 %v1521
        %v1604 = vunpack.c.l.b16 %v1522
        %v1605 = vunpack.c.l.b16 %v1523
        %v1606 = vunpack.c.h.b16 %v1522
        %v1607 = vunpack.c.h.b16 %v1523
        %v1608 = vunpack.c.l.b16 %v1524
        %v1609 = vunpack.c.l.b16 %v1525
        %v1610 = vunpack.c.h.b16 %v1524
        %v1611 = vunpack.c.h.b16 %v1525
        %v1612 = vunpack.c.l.b16 %v1526
        %v1613 = vunpack.c.l.b16 %v1527
        %v1614 = vunpack.c.h.b16 %v1526
        %v1615 = vunpack.c.h.b16 %v1527
        %v1616 = vunpack.c.l.b16 %v1528
        %v1617 = vunpack.c.l.b16 %v1529
        %v1618 = vunpack.c.h.b16 %v1528
        %v1619 = vunpack.c.h.b16 %v1529
        %v1620 = vunpack.c.l.b16 %v1530
        %v1621 = vunpack.c.l.b16 %v1531
        %v1622 = vunpack.c.h.b16 %v1530
        %v1623 = vunpack.c.h.b16 %v1531
        %v1624 = vunpack.c.l.b16 %v1532
        %v1625 = vunpack.c.l.b16 %v1533
        %v1626 = vunpack.c.h.b16 %v1532
        %v1627 = vunpack.c.h.b16 %v1533
        %v1628 = vunpack.c.l.b16 %v1534
        %v1629 = vunpack.c.l.b16 %v1535
        %v1630 = vunpack.c.h.b16 %v1534
        %v1631 = vunpack.c.h.b16 %v1535
        %v1632 = vpack.c.b16 %v1569, %v1568
        %v1633 = vpack.c.b16 %v1571, %v1570
        %v1634 = vpack.c.b16 %v1573, %v1572
        %v1635 = vpack.c.b16 %v1575, %v1574
        %v1636 = vpack.c.b16 %v1577, %v1576
        %v1637 = vpack.c.b16 %v1579, %v1578
        %v1638 = vpack.c.b16 %v1581, %v1580
        %v1639 = vpack.c.b16 %v1583, %v1582
        %v1640 = vpack.c.b16 %v1585, %v1584
        %v1641 = vpack.c.b16 %v1587, %v1586
        %v1642 = vpack.c.b16 %v1589, %v1588
        %v1643 = vpack.c.b16 %v1591, %v1590
        %v1644 = vpack.c.b16 %v1593, %v1592
        %v1645 = vpack.c.b16 %v1595, %v1594
        %v1646 = vpack.c.b16 %v1597, %v1596
        %v1647 = vpack.c.b16 %v1599, %v1598
        %v1648 = vpack.c.b16 %v1601, %v1600
        %v1649 = vpack.c.b16 %v1603, %v1602
        %v1650 = vpack.c.b16 %v1605, %v1604
        %v1651 = vpack.c.b16 %v1607, %v1606
        %v1652 = vpack.c.b16 %v1609, %v1608
        %v1653 = vpack.c.b16 %v1611, %v1610
        %v1654 = vpack.c.b16 %v1613, %v1612
        %v1655 = vpack.c.b16 %v1615, %v1614
        %v1656 = vpack.c.b16 %v1617, %v1616
        %v1657 = vpack.c.b16 %v1619, %v1618
        %v1658 = vpack.c.b16 %v1621, %v1620
        %v1659 = vpack.c.b16 %v1623, %v1622
        %v1660 = vpack.c.b16 %v1625, %v1624
        %v1661 = vpack.c.b16 %v1627, %v1626
        %v1662 = vpack.c.b16 %v1629, %v1628
        %v1663 = vpack.c.b16 %v1631, %v1630
        %1696 = vst [vmem:[%s336] sm:$0xff] %v1632
        %1697 = vst [vmem:[%s336 + $0x8] sm:$0xff] %v1633
        %1698 = vst [vmem:[%s336 + $0x10] sm:$0xff] %v1634
        %1699 = vst [vmem:[%s336 + $0x18] sm:$0xff] %v1635
        %1700 = vst [vmem:[%s336 + $0x20] sm:$0xff] %v1636
        %1701 = vst [vmem:[%s336 + $0x28] sm:$0xff] %v1637
        %1702 = vst [vmem:[%s336 + $0x30] sm:$0xff] %v1638
        %1703 = vst [vmem:[%s336 + $0x38] sm:$0xff] %v1639
        %1704 = vst [vmem:[%s336 + $0x40] sm:$0xff] %v1640
        %1705 = vst [vmem:[%s336 + $0x48] sm:$0xff] %v1641
        %1706 = vst [vmem:[%s336 + $0x50] sm:$0xff] %v1642
        %1707 = vst [vmem:[%s336 + $0x58] sm:$0xff] %v1643
        %1708 = vst [vmem:[%s336 + $0x60] sm:$0xff] %v1644
        %1709 = vst [vmem:[%s336 + $0x68] sm:$0xff] %v1645
        %1710 = vst [vmem:[%s336 + $0x70] sm:$0xff] %v1646
        %1711 = vst [vmem:[%s336 + $0x78] sm:$0xff] %v1647
        %1712 = vst [vmem:[%s336 + $0x80] sm:$0xff] %v1648
        %1713 = vst [vmem:[%s336 + $0x88] sm:$0xff] %v1649
        %1714 = vst [vmem:[%s336 + $0x90] sm:$0xff] %v1650
        %1715 = vst [vmem:[%s336 + $0x98] sm:$0xff] %v1651
        %1716 = vst [vmem:[%s336 + $0xa0] sm:$0xff] %v1652
        %1717 = vst [vmem:[%s336 + $0xa8] sm:$0xff] %v1653
        %1718 = vst [vmem:[%s336 + $0xb0] sm:$0xff] %v1654
        %1719 = vst [vmem:[%s336 + $0xb8] sm:$0xff] %v1655
        %1720 = vst [vmem:[%s336 + $0xc0] sm:$0xff] %v1656
        %1721 = vst [vmem:[%s336 + $0xc8] sm:$0xff] %v1657
        %1722 = vst [vmem:[%s336 + $0xd0] sm:$0xff] %v1658
        %1723 = vst [vmem:[%s336 + $0xd8] sm:$0xff] %v1659
        %1724 = vst [vmem:[%s336 + $0xe0] sm:$0xff] %v1660
        %1725 = vst [vmem:[%s336 + $0xe8] sm:$0xff] %v1661
        %1726 = vst [vmem:[%s336 + $0xf0] sm:$0xff] %v1662
        %1727 = vst [vmem:[%s336 + $0xf8] sm:$0xff] %v1663
        %s1728 = sand.u32 %s168, 1
        %s1729 = scalar_lea.sflag [#allocation4], %s1728
        %s1730 = sand.u32 %s168, 1
        %s1731 = smul.addr %s1730, 256
        %s1732 = scalar_lea.vmem [#allocation10], %s1731
        // Predicated region
        $region57: #{tpu_custom_call.1} parent=39 // pred_check
          %p1733 = pneg %p178
        $region58: #{tpu_custom_call.1} parent=39 // pred_check_branch
          %1735 = sbr.rel (%p1733) target = $region60
        $region59: #{tpu_custom_call.1} parent=39 // pred_region
          %s1736 = smul.u32 32, %s30
          %s1737 = smul.u32 2, %s31
          %s1739 = ssub.s32 4096, 4096
          %1740 = vsyncadd %s1729, %s1739
          %s1741 = smul.addr %s1736, 6
          %s1742 = sadd.s32 %s1737, %s1741
          %s1743 = smul.addr %s1742, 64
          %s1744 = scalar_lea.hbm %s5, %s1743
          %s1745 = sshll.u32 %s1732, 4
          %s1746 = int_to_ptr.vmem [resolvable:$true] %s1745
          %1751 = dma.vmem_to_hbm [thread:$0]  %s1746, 4096, %s1744, %s1729, 128, 384, 8
        $region60: #{tpu_custom_call.1} parent=39 // pred_fallthru
          _
      $region40: #{tpu_custom_call.1} parent=5 // pred_fallthru
        _
      %p1752 = scmp.le.s32.totalorder 2, %s21
      // Predicated region
      $region61: #{tpu_custom_call.1} parent=5 // pred_check
        %p1753 = pneg %p1752
      $region62: #{tpu_custom_call.1} parent=5 // pred_check_branch
        %1755 = sbr.rel (%p1753) target = $region64
      $region63: #{tpu_custom_call.1} parent=5 // pred_region
        %s1756 = ssub.s32 %s21, 2
        // Predicated region
        $region65: #{tpu_custom_call.1} parent=63 // pred_check
          %p1757 = pneg %p184
        $region66: #{tpu_custom_call.1} parent=63 // pred_check_branch
          %1759 = sbr.rel (%p1757) target = $region68
        $region67: #{tpu_custom_call.1} parent=63 // pred_region
          %s1760 = sand.u32 %s169, 1
          %s1761 = scalar_lea.sflag [#allocation4], %s1760
          %s1762 = sand.u32 %s169, 1
          %s1763 = smul.addr %s1762, 256
          %s1764 = scalar_lea.vmem [#allocation10], %s1763
          %1765 = dma.done %s1761, 4096
        $region68: #{tpu_custom_call.1} parent=63 // pred_fallthru
          _
      $region64: #{tpu_custom_call.1} parent=5 // pred_fallthru
        _
    $region6: #{tpu_custom_call.1} parent=1 // loop_footer
      %s25 = sadd.s32 1, %s21
    $region7: #{tpu_custom_call.1} parent=1 // loop_footer_branch
      %20 = sbr.rel target = $region3
    $region8: #{tpu_custom_call.1} parent=1 // loop_exit
      _
    %1766 = vsyncpa [#allocation3], 1
    %s1767 = scalar_lea.sflag [#allocation3], 1
    %1768 = vsyncpa %s1767, 1
    %1769 = vsyncpa [#allocation6], 1
    %1770 = vsyncpa [#allocation9], 1
    %s1771 = scalar_lea.sflag [#allocation9], 1
    %1772 = vsyncpa %s1771, 1
    %1773 = vsyncpa [#allocation4], 1
    %s1774 = scalar_lea.sflag [#allocation4], 1
    %1775 = vsyncpa %s1774, 1

</llo_original>
